<compile_context>
chip_gen: v7x
topology: tpu7x:2x2x1
jax: 0.10.0
libtpu: 0.0.40
codegen_flags: <defaults>
</compile_context>

<pallas_src>
import functools

import jax
import jax.numpy as jnp
from jax.experimental import pallas as pl
from jax.experimental.pallas import tpu as pltpu

IN_FEATURES = 22
HIDDEN = 128
N_LAYERS = 10
OUT_FEATURES = 18
IN_PAD = 128   # lane-dense padded input width
OUT_PAD = 128  # lane-dense padded output width (sliced back to 18 in the wrapper)


def _round_up(x, m):
    return (x + m - 1) // m * m


def _choose_tile(b, tile_cap):
    """Batch tile: multiple of 8, >=2 grid steps when B > 8 (v7x megacore),
    and minimal padded rows for ragged B (searched down to 128 rows/step)."""
    b8 = _round_up(b, 8)
    if b8 <= 8:
        return b8
    cap = max(8, min(_round_up(tile_cap, 8), _round_up(pl.cdiv(b8, 2), 8)))
    lo = min(cap, 128)
    best_t, best_pad = cap, _round_up(b, cap) - b
    for t in range(cap - 8, lo - 1, -8):
        pad = _round_up(b, t) - b
        if pad < best_pad:
            best_t, best_pad = t, pad
    return best_t


def _pinn_kernel(x_ref, w_in_ref, b_in_ref, w_h_ref, b_h_ref,
                 w_out_ref, b_out_ref, o_ref):
    wdt = w_in_ref.dtype  # compute (MXU operand) dtype: bf16 or f32

    # Input layer: (TB, 128) @ (128, 128) + (1, 128), ReLU   [f32 accumulate]
    h = jnp.dot(x_ref[...].astype(wdt), w_in_ref[...],
                preferred_element_type=jnp.float32)
    h = jnp.maximum(h + b_in_ref[...], 0.0)

    # 10 hidden layers (static unroll): (TB, 128) @ (128, 128) + (1, 128), ReLU
    for l in range(N_LAYERS):
        h = jnp.dot(h.astype(wdt), w_h_ref[l],
                    preferred_element_type=jnp.float32)
        h = jnp.maximum(h + b_h_ref[l], 0.0)

    # Output layer, zero-padded to 128 lanes: (TB, 128) @ (128, 128) + (1, 128)
    out = jnp.dot(h.astype(wdt), w_out_ref[...],
                  preferred_element_type=jnp.float32)
    o_ref[...] = (out + b_out_ref[...]).astype(o_ref.dtype)


def prepare_params(params, use_bf16=True):
    """One-time padding/casting of the raw (f32, unpadded) parameters."""
    w_in, b_in, w_h, b_h, w_out, b_out = params
    cdt = jnp.bfloat16 if use_bf16 else jnp.float32
    w_in_p = jnp.pad(w_in, ((0, IN_PAD - IN_FEATURES), (0, 0))).astype(cdt)
    w_out_p = jnp.pad(w_out, ((0, 0), (0, OUT_PAD - OUT_FEATURES))).astype(cdt)
    b_out_p = jnp.pad(b_out, ((0, 0), (0, OUT_PAD - OUT_FEATURES))).astype(jnp.float32)
    return (w_in_p, b_in.astype(jnp.float32), w_h.astype(cdt),
            b_h.astype(jnp.float32), w_out_p, b_out_p)


@functools.partial(jax.jit, static_argnames=("tile_b",))
def pinn_forward(x, prepared, *, tile_b=512):
    """x: (B, 22) float32 -> (B, 18) float32. Works for any batch size B >= 1."""
    w_in, b_in, w_h, b_h, w_out, b_out = prepared
    b = x.shape[0]

    tile = _choose_tile(b, tile_b)
    b_pad = _round_up(b, tile)
    grid = (b_pad // tile,)

    # Lane-dense, padded input (padded feature columns hit zero rows of w_in).
    x_p = jnp.pad(x, ((0, b_pad - b), (0, IN_PAD - IN_FEATURES)))

    # Weights/biases broadcast to every batch tile (constant index maps;
    # Pallas fetches them once and keeps them VMEM-resident across the grid).
    const2 = lambda shape: pl.BlockSpec(shape, lambda i: (0, 0))
    const3 = lambda shape: pl.BlockSpec(shape, lambda i: (0, 0, 0))

    wbytes = w_in.dtype.itemsize
    flops = 2 * b_pad * (IN_PAD * HIDDEN
                         + N_LAYERS * HIDDEN * HIDDEN
                         + HIDDEN * OUT_PAD)
    weight_bytes = (wbytes * (IN_PAD * HIDDEN + N_LAYERS * HIDDEN * HIDDEN
                              + HIDDEN * OUT_PAD)
                    + 4 * (HIDDEN + N_LAYERS * HIDDEN + OUT_PAD))
    bytes_accessed = weight_bytes + 4 * b_pad * (IN_PAD + OUT_PAD)

    out_padded = pl.pallas_call(
        _pinn_kernel,
        out_shape=jax.ShapeDtypeStruct((b_pad, OUT_PAD), jnp.float32),
        grid_spec=pltpu.PrefetchScalarGridSpec(
            num_scalar_prefetch=0,
            grid=grid,
            in_specs=[
                pl.BlockSpec((tile, IN_PAD), lambda i: (i, 0)),   # x (padded, f32)
                const2((IN_PAD, HIDDEN)),                         # w_in  (padded)
                const2((1, HIDDEN)),                              # b_in  (f32)
                const3((N_LAYERS, HIDDEN, HIDDEN)),               # w_h   (stacked)
                const3((N_LAYERS, 1, HIDDEN)),                    # b_h   (f32)
                const2((HIDDEN, OUT_PAD)),                        # w_out (padded)
                const2((1, OUT_PAD)),                             # b_out (f32, padded)
            ],
            out_specs=pl.BlockSpec((tile, OUT_PAD), lambda i: (i, 0)),
        ),
        compiler_params=pltpu.CompilerParams(
            dimension_semantics=("parallel",)),
        cost_estimate=pl.CostEstimate(
            flops=flops, transcendentals=0, bytes_accessed=bytes_accessed),
    )(x_p, w_in, b_in, w_h, b_h, w_out, b_out)

    # TODO(synk): for fused downstream consumers, return the padded (b_pad, 128)
    # buffer directly to avoid this extra HBM slice pass.
    return out_padded[:b, :OUT_FEATURES]


def init_params(key):
    """Deterministic PyTorch-style uniform(-1/sqrt(fan_in), 1/sqrt(fan_in)) init."""
    ks = jax.random.split(key, 2 * (N_LAYERS + 2))

    def lin(kw, kb, fan_in, fan_out):
        bound = 1.0 / jnp.sqrt(fan_in)
        w = jax.random.uniform(kw, (fan_in, fan_out), jnp.float32, -bound, bound)
        b = jax.random.uniform(kb, (1, fan_out), jnp.float32, -bound, bound)
        return w, b

    w_in, b_in = lin(ks[0], ks[1], IN_FEATURES, HIDDEN)
    w_hs, b_hs = [], []
    for l in range(N_LAYERS):
        w, bb = lin(ks[2 + 2 * l], ks[3 + 2 * l], HIDDEN, HIDDEN)
        w_hs.append(w)
        b_hs.append(bb)
    w_h = jnp.stack(w_hs, axis=0)                       # (10, 128, 128)
    b_h = jnp.stack(b_hs, axis=0)                       # (10, 1, 128)
    w_out, b_out = lin(ks[-2], ks[-1], HIDDEN, OUT_FEATURES)
    return w_in, b_in, w_h, b_h, w_out, b_out


def reference_forward(x, params):
    """Pure f32 JAX reference (matches the PyTorch module's math)."""
    w_in, b_in, w_h, b_h, w_out, b_out = params
    h = jnp.maximum(x @ w_in + b_in, 0.0)
    for l in range(N_LAYERS):
        h = jnp.maximum(h @ w_h[l] + b_h[l], 0.0)
    return h @ w_out + b_out


def reference_forward_matched(x, params, cdt):
    """Reference using the same bf16-operand / f32-accumulate recipe as the kernel."""
    w_in, b_in, w_h, b_h, w_out, b_out = params
    h = jnp.dot(x.astype(cdt), w_in.astype(cdt), preferred_element_type=jnp.float32)
    h = jnp.maximum(h + b_in, 0.0)
    for l in range(N_LAYERS):
        h = jnp.dot(h.astype(cdt), w_h[l].astype(cdt),
                    preferred_element_type=jnp.float32)
        h = jnp.maximum(h + b_h[l], 0.0)
    return jnp.dot(h.astype(cdt), w_out.astype(cdt),
                   preferred_element_type=jnp.float32) + b_out


if __name__ == "__main__":
    key = jax.random.PRNGKey(0)
    k_x, k_x2, k_p = jax.random.split(key, 3)
    params = init_params(k_p)
    prep_bf16 = prepare_params(params, use_bf16=True)   # default fast path
    prep_f32 = prepare_params(params, use_bf16=False)   # full-f32 fallback path

    # Small batch (single grid step, shrunk tile), bf16 MXU path.
    batch = 8
    x = jax.random.normal(k_x, (batch, IN_FEATURES), jnp.float32)
    out = jax.block_until_ready(pinn_forward(x, prep_bf16))
    assert out.shape == (batch, OUT_FEATURES), out.shape
    ref_m = reference_forward_matched(x, params, jnp.bfloat16)
    ref_f = reference_forward(x, params)
    assert jnp.allclose(out, ref_m, atol=2e-3, rtol=2e-3), "mismatch vs matched bf16 ref (B=8)"
    assert jnp.allclose(out, ref_f, atol=1e-1, rtol=1e-1), "mismatch vs f32 ref (B=8)"

    # Ragged batch (tile=152, b_pad=304, 2-step grid -> both v7x TCs), bf16 path.
    batch2 = 300
    x2 = jax.random.normal(k_x2, (batch2, IN_FEATURES), jnp.float32)
    out2 = jax.block_until_ready(pinn_forward(x2, prep_bf16))
    assert out2.shape == (batch2, OUT_FEATURES), out2.shape
    ref_m2 = reference_forward_matched(x2, params, jnp.bfloat16)
    ref_f2 = reference_forward(x2, params)
    assert jnp.allclose(out2, ref_m2, atol=2e-3, rtol=2e-3), "mismatch vs matched bf16 ref (B=300)"
    assert jnp.allclose(out2, ref_f2, atol=1e-1, rtol=1e-1), "mismatch vs f32 ref (B=300)"

    # Full-f32 path still matches the f32 reference tightly.
    out3 = jax.block_until_ready(pinn_forward(x2, prep_f32))
    assert jnp.allclose(out3, ref_f2, atol=1e-4, rtol=1e-4), "mismatch vs f32 ref (f32 path)"

    print("KERNEL_OK")
</pallas_src>

<mosaic_0001>
module attributes {stable_mosaic.version = 11 : i64} {
  func.func @_pinn_kernel(%arg0: i32, %arg1: memref<8x128xf32, #tpu.memory_space<vmem>>, %arg2: memref<128x128xbf16, #tpu.memory_space<vmem>>, %arg3: memref<1x128xf32, #tpu.memory_space<vmem>>, %arg4: memref<10x128x128xbf16, #tpu.memory_space<vmem>>, %arg5: memref<10x1x128xf32, #tpu.memory_space<vmem>>, %arg6: memref<128x128xbf16, #tpu.memory_space<vmem>>, %arg7: memref<1x128xf32, #tpu.memory_space<vmem>>, %arg8: memref<8x128xf32, #tpu.memory_space<vmem>>) attributes {dimension_semantics = [#tpu.dimension_semantics<parallel>], iteration_bounds = array<i64: 1>, scalar_prefetch = 0 : i64, scratch_operands = 0 : i64, tpu.core_type = #tpu.core_type<tc>, window_params = [{transform_indices = @transform_0, window_bounds = array<i64: 8, 128>}, {pipeline_mode = #tpu.pipeline_mode<synchronous>, transform_indices = @transform_1, window_bounds = array<i64: 128, 128>}, {pipeline_mode = #tpu.pipeline_mode<synchronous>, transform_indices = @transform_2, window_bounds = array<i64: 1, 128>}, {pipeline_mode = #tpu.pipeline_mode<synchronous>, transform_indices = @transform_3, window_bounds = array<i64: 10, 128, 128>}, {pipeline_mode = #tpu.pipeline_mode<synchronous>, transform_indices = @transform_4, window_bounds = array<i64: 10, 1, 128>}, {pipeline_mode = #tpu.pipeline_mode<synchronous>, transform_indices = @transform_5, window_bounds = array<i64: 128, 128>}, {pipeline_mode = #tpu.pipeline_mode<synchronous>, transform_indices = @transform_6, window_bounds = array<i64: 1, 128>}, {transform_indices = @transform_7, window_bounds = array<i64: 8, 128>}]} {
    %c0 = arith.constant 0 : index
    %c0_0 = arith.constant 0 : index
    %0 = vector.load %arg1[%c0, %c0_0] : memref<8x128xf32, #tpu.memory_space<vmem>>, vector<8x128xf32>
    %1 = arith.truncf %0 : vector<8x128xf32> to vector<8x128xbf16>
    %c0_1 = arith.constant 0 : index
    %c0_2 = arith.constant 0 : index
    %2 = vector.load %arg2[%c0_1, %c0_2] : memref<128x128xbf16, #tpu.memory_space<vmem>>, vector<128x128xbf16>
    %cst = arith.constant dense<0.000000e+00> : vector<8x128xf32>
    %3 = tpu.matmul %1, %2, %cst {dimension_numbers = #tpu.dot_dimension_numbers<[1], [0], [0], [1], [0, 0, 1, 1], [], []>} : vector<8x128xbf16>, vector<128x128xbf16>, vector<8x128xf32> -> vector<8x128xf32>
    %c0_3 = arith.constant 0 : index
    %c0_4 = arith.constant 0 : index
    %4 = vector.load %arg3[%c0_3, %c0_4] : memref<1x128xf32, #tpu.memory_space<vmem>>, vector<1x128xf32>
    %5 = vector.broadcast %4 : vector<1x128xf32> to vector<8x128xf32>
    %6 = arith.addf %3, %5 : vector<8x128xf32>
    %cst_5 = arith.constant 0.000000e+00 : f32
    %7 = vector.broadcast %cst_5 : f32 to vector<8x128xf32>
    %8 = arith.maximumf %6, %7 : vector<8x128xf32>
    %9 = arith.truncf %8 : vector<8x128xf32> to vector<8x128xbf16>
    %c0_6 = arith.constant 0 : index
    %c0_7 = arith.constant 0 : index
    %c0_8 = arith.constant 0 : index
    %10 = vector.load %arg4[%c0_6, %c0_7, %c0_8] : memref<10x128x128xbf16, #tpu.memory_space<vmem>>, vector<1x128x128xbf16>
    %11 = vector.shape_cast %10 : vector<1x128x128xbf16> to vector<128x128xbf16>
    %cst_9 = arith.constant dense<0.000000e+00> : vector<8x128xf32>
    %12 = tpu.matmul %9, %11, %cst_9 {dimension_numbers = #tpu.dot_dimension_numbers<[1], [0], [0], [1], [0, 0, 1, 1], [], []>} : vector<8x128xbf16>, vector<128x128xbf16>, vector<8x128xf32> -> vector<8x128xf32>
    %c0_10 = arith.constant 0 : index
    %c0_11 = arith.constant 0 : index
    %c0_12 = arith.constant 0 : index
    %13 = vector.load %arg5[%c0_10, %c0_11, %c0_12] : memref<10x1x128xf32, #tpu.memory_space<vmem>>, vector<1x1x128xf32>
    %14 = vector.shape_cast %13 : vector<1x1x128xf32> to vector<1x128xf32>
    %15 = vector.broadcast %14 : vector<1x128xf32> to vector<8x128xf32>
    %16 = arith.addf %12, %15 : vector<8x128xf32>
    %cst_13 = arith.constant 0.000000e+00 : f32
    %17 = vector.broadcast %cst_13 : f32 to vector<8x128xf32>
    %18 = arith.maximumf %16, %17 : vector<8x128xf32>
    %19 = arith.truncf %18 : vector<8x128xf32> to vector<8x128xbf16>
    %c1 = arith.constant 1 : index
    %c0_14 = arith.constant 0 : index
    %c0_15 = arith.constant 0 : index
    %20 = vector.load %arg4[%c1, %c0_14, %c0_15] : memref<10x128x128xbf16, #tpu.memory_space<vmem>>, vector<1x128x128xbf16>
    %21 = vector.shape_cast %20 : vector<1x128x128xbf16> to vector<128x128xbf16>
    %cst_16 = arith.constant dense<0.000000e+00> : vector<8x128xf32>
    %22 = tpu.matmul %19, %21, %cst_16 {dimension_numbers = #tpu.dot_dimension_numbers<[1], [0], [0], [1], [0, 0, 1, 1], [], []>} : vector<8x128xbf16>, vector<128x128xbf16>, vector<8x128xf32> -> vector<8x128xf32>
    %c1_17 = arith.constant 1 : index
    %c0_18 = arith.constant 0 : index
    %c0_19 = arith.constant 0 : index
    %23 = vector.load %arg5[%c1_17, %c0_18, %c0_19] : memref<10x1x128xf32, #tpu.memory_space<vmem>>, vector<1x1x128xf32>
    %24 = vector.shape_cast %23 : vector<1x1x128xf32> to vector<1x128xf32>
    %25 = vector.broadcast %24 : vector<1x128xf32> to vector<8x128xf32>
    %26 = arith.addf %22, %25 : vector<8x128xf32>
    %cst_20 = arith.constant 0.000000e+00 : f32
    %27 = vector.broadcast %cst_20 : f32 to vector<8x128xf32>
    %28 = arith.maximumf %26, %27 : vector<8x128xf32>
    %29 = arith.truncf %28 : vector<8x128xf32> to vector<8x128xbf16>
    %c2 = arith.constant 2 : index
    %c0_21 = arith.constant 0 : index
    %c0_22 = arith.constant 0 : index
    %30 = vector.load %arg4[%c2, %c0_21, %c0_22] : memref<10x128x128xbf16, #tpu.memory_space<vmem>>, vector<1x128x128xbf16>
    %31 = vector.shape_cast %30 : vector<1x128x128xbf16> to vector<128x128xbf16>
    %cst_23 = arith.constant dense<0.000000e+00> : vector<8x128xf32>
    %32 = tpu.matmul %29, %31, %cst_23 {dimension_numbers = #tpu.dot_dimension_numbers<[1], [0], [0], [1], [0, 0, 1, 1], [], []>} : vector<8x128xbf16>, vector<128x128xbf16>, vector<8x128xf32> -> vector<8x128xf32>
    %c2_24 = arith.constant 2 : index
    %c0_25 = arith.constant 0 : index
    %c0_26 = arith.constant 0 : index
    %33 = vector.load %arg5[%c2_24, %c0_25, %c0_26] : memref<10x1x128xf32, #tpu.memory_space<vmem>>, vector<1x1x128xf32>
    %34 = vector.shape_cast %33 : vector<1x1x128xf32> to vector<1x128xf32>
    %35 = vector.broadcast %34 : vector<1x128xf32> to vector<8x128xf32>
    %36 = arith.addf %32, %35 : vector<8x128xf32>
    %cst_27 = arith.constant 0.000000e+00 : f32
    %37 = vector.broadcast %cst_27 : f32 to vector<8x128xf32>
    %38 = arith.maximumf %36, %37 : vector<8x128xf32>
    %39 = arith.truncf %38 : vector<8x128xf32> to vector<8x128xbf16>
    %c3 = arith.constant 3 : index
    %c0_28 = arith.constant 0 : index
    %c0_29 = arith.constant 0 : index
    %40 = vector.load %arg4[%c3, %c0_28, %c0_29] : memref<10x128x128xbf16, #tpu.memory_space<vmem>>, vector<1x128x128xbf16>
    %41 = vector.shape_cast %40 : vector<1x128x128xbf16> to vector<128x128xbf16>
    %cst_30 = arith.constant dense<0.000000e+00> : vector<8x128xf32>
    %42 = tpu.matmul %39, %41, %cst_30 {dimension_numbers = #tpu.dot_dimension_numbers<[1], [0], [0], [1], [0, 0, 1, 1], [], []>} : vector<8x128xbf16>, vector<128x128xbf16>, vector<8x128xf32> -> vector<8x128xf32>
    %c3_31 = arith.constant 3 : index
    %c0_32 = arith.constant 0 : index
    %c0_33 = arith.constant 0 : index
    %43 = vector.load %arg5[%c3_31, %c0_32, %c0_33] : memref<10x1x128xf32, #tpu.memory_space<vmem>>, vector<1x1x128xf32>
    %44 = vector.shape_cast %43 : vector<1x1x128xf32> to vector<1x128xf32>
    %45 = vector.broadcast %44 : vector<1x128xf32> to vector<8x128xf32>
    %46 = arith.addf %42, %45 : vector<8x128xf32>
    %cst_34 = arith.constant 0.000000e+00 : f32
    %47 = vector.broadcast %cst_34 : f32 to vector<8x128xf32>
    %48 = arith.maximumf %46, %47 : vector<8x128xf32>
    %49 = arith.truncf %48 : vector<8x128xf32> to vector<8x128xbf16>
    %c4 = arith.constant 4 : index
    %c0_35 = arith.constant 0 : index
    %c0_36 = arith.constant 0 : index
    %50 = vector.load %arg4[%c4, %c0_35, %c0_36] : memref<10x128x128xbf16, #tpu.memory_space<vmem>>, vector<1x128x128xbf16>
    %51 = vector.shape_cast %50 : vector<1x128x128xbf16> to vector<128x128xbf16>
    %cst_37 = arith.constant dense<0.000000e+00> : vector<8x128xf32>
    %52 = tpu.matmul %49, %51, %cst_37 {dimension_numbers = #tpu.dot_dimension_numbers<[1], [0], [0], [1], [0, 0, 1, 1], [], []>} : vector<8x128xbf16>, vector<128x128xbf16>, vector<8x128xf32> -> vector<8x128xf32>
    %c4_38 = arith.constant 4 : index
    %c0_39 = arith.constant 0 : index
    %c0_40 = arith.constant 0 : index
    %53 = vector.load %arg5[%c4_38, %c0_39, %c0_40] : memref<10x1x128xf32, #tpu.memory_space<vmem>>, vector<1x1x128xf32>
    %54 = vector.shape_cast %53 : vector<1x1x128xf32> to vector<1x128xf32>
    %55 = vector.broadcast %54 : vector<1x128xf32> to vector<8x128xf32>
    %56 = arith.addf %52, %55 : vector<8x128xf32>
    %cst_41 = arith.constant 0.000000e+00 : f32
    %57 = vector.broadcast %cst_41 : f32 to vector<8x128xf32>
    %58 = arith.maximumf %56, %57 : vector<8x128xf32>
    %59 = arith.truncf %58 : vector<8x128xf32> to vector<8x128xbf16>
    %c5 = arith.constant 5 : index
    %c0_42 = arith.constant 0 : index
    %c0_43 = arith.constant 0 : index
    %60 = vector.load %arg4[%c5, %c0_42, %c0_43] : memref<10x128x128xbf16, #tpu.memory_space<vmem>>, vector<1x128x128xbf16>
    %61 = vector.shape_cast %60 : vector<1x128x128xbf16> to vector<128x128xbf16>
    %cst_44 = arith.constant dense<0.000000e+00> : vector<8x128xf32>
    %62 = tpu.matmul %59, %61, %cst_44 {dimension_numbers = #tpu.dot_dimension_numbers<[1], [0], [0], [1], [0, 0, 1, 1], [], []>} : vector<8x128xbf16>, vector<128x128xbf16>, vector<8x128xf32> -> vector<8x128xf32>
    %c5_45 = arith.constant 5 : index
    %c0_46 = arith.constant 0 : index
    %c0_47 = arith.constant 0 : index
    %63 = vector.load %arg5[%c5_45, %c0_46, %c0_47] : memref<10x1x128xf32, #tpu.memory_space<vmem>>, vector<1x1x128xf32>
    %64 = vector.shape_cast %63 : vector<1x1x128xf32> to vector<1x128xf32>
    %65 = vector.broadcast %64 : vector<1x128xf32> to vector<8x128xf32>
    %66 = arith.addf %62, %65 : vector<8x128xf32>
    %cst_48 = arith.constant 0.000000e+00 : f32
    %67 = vector.broadcast %cst_48 : f32 to vector<8x128xf32>
    %68 = arith.maximumf %66, %67 : vector<8x128xf32>
    %69 = arith.truncf %68 : vector<8x128xf32> to vector<8x128xbf16>
    %c6 = arith.constant 6 : index
    %c0_49 = arith.constant 0 : index
    %c0_50 = arith.constant 0 : index
    %70 = vector.load %arg4[%c6, %c0_49, %c0_50] : memref<10x128x128xbf16, #tpu.memory_space<vmem>>, vector<1x128x128xbf16>
    %71 = vector.shape_cast %70 : vector<1x128x128xbf16> to vector<128x128xbf16>
    %cst_51 = arith.constant dense<0.000000e+00> : vector<8x128xf32>
    %72 = tpu.matmul %69, %71, %cst_51 {dimension_numbers = #tpu.dot_dimension_numbers<[1], [0], [0], [1], [0, 0, 1, 1], [], []>} : vector<8x128xbf16>, vector<128x128xbf16>, vector<8x128xf32> -> vector<8x128xf32>
    %c6_52 = arith.constant 6 : index
    %c0_53 = arith.constant 0 : index
    %c0_54 = arith.constant 0 : index
    %73 = vector.load %arg5[%c6_52, %c0_53, %c0_54] : memref<10x1x128xf32, #tpu.memory_space<vmem>>, vector<1x1x128xf32>
    %74 = vector.shape_cast %73 : vector<1x1x128xf32> to vector<1x128xf32>
    %75 = vector.broadcast %74 : vector<1x128xf32> to vector<8x128xf32>
    %76 = arith.addf %72, %75 : vector<8x128xf32>
    %cst_55 = arith.constant 0.000000e+00 : f32
    %77 = vector.broadcast %cst_55 : f32 to vector<8x128xf32>
    %78 = arith.maximumf %76, %77 : vector<8x128xf32>
    %79 = arith.truncf %78 : vector<8x128xf32> to vector<8x128xbf16>
    %c7 = arith.constant 7 : index
    %c0_56 = arith.constant 0 : index
    %c0_57 = arith.constant 0 : index
    %80 = vector.load %arg4[%c7, %c0_56, %c0_57] : memref<10x128x128xbf16, #tpu.memory_space<vmem>>, vector<1x128x128xbf16>
    %81 = vector.shape_cast %80 : vector<1x128x128xbf16> to vector<128x128xbf16>
    %cst_58 = arith.constant dense<0.000000e+00> : vector<8x128xf32>
    %82 = tpu.matmul %79, %81, %cst_58 {dimension_numbers = #tpu.dot_dimension_numbers<[1], [0], [0], [1], [0, 0, 1, 1], [], []>} : vector<8x128xbf16>, vector<128x128xbf16>, vector<8x128xf32> -> vector<8x128xf32>
    %c7_59 = arith.constant 7 : index
    %c0_60 = arith.constant 0 : index
    %c0_61 = arith.constant 0 : index
    %83 = vector.load %arg5[%c7_59, %c0_60, %c0_61] : memref<10x1x128xf32, #tpu.memory_space<vmem>>, vector<1x1x128xf32>
    %84 = vector.shape_cast %83 : vector<1x1x128xf32> to vector<1x128xf32>
    %85 = vector.broadcast %84 : vector<1x128xf32> to vector<8x128xf32>
    %86 = arith.addf %82, %85 : vector<8x128xf32>
    %cst_62 = arith.constant 0.000000e+00 : f32
    %87 = vector.broadcast %cst_62 : f32 to vector<8x128xf32>
    %88 = arith.maximumf %86, %87 : vector<8x128xf32>
    %89 = arith.truncf %88 : vector<8x128xf32> to vector<8x128xbf16>
    %c8 = arith.constant 8 : index
    %c0_63 = arith.constant 0 : index
    %c0_64 = arith.constant 0 : index
    %90 = vector.load %arg4[%c8, %c0_63, %c0_64] : memref<10x128x128xbf16, #tpu.memory_space<vmem>>, vector<1x128x128xbf16>
    %91 = vector.shape_cast %90 : vector<1x128x128xbf16> to vector<128x128xbf16>
    %cst_65 = arith.constant dense<0.000000e+00> : vector<8x128xf32>
    %92 = tpu.matmul %89, %91, %cst_65 {dimension_numbers = #tpu.dot_dimension_numbers<[1], [0], [0], [1], [0, 0, 1, 1], [], []>} : vector<8x128xbf16>, vector<128x128xbf16>, vector<8x128xf32> -> vector<8x128xf32>
    %c8_66 = arith.constant 8 : index
    %c0_67 = arith.constant 0 : index
    %c0_68 = arith.constant 0 : index
    %93 = vector.load %arg5[%c8_66, %c0_67, %c0_68] : memref<10x1x128xf32, #tpu.memory_space<vmem>>, vector<1x1x128xf32>
    %94 = vector.shape_cast %93 : vector<1x1x128xf32> to vector<1x128xf32>
    %95 = vector.broadcast %94 : vector<1x128xf32> to vector<8x128xf32>
    %96 = arith.addf %92, %95 : vector<8x128xf32>
    %cst_69 = arith.constant 0.000000e+00 : f32
    %97 = vector.broadcast %cst_69 : f32 to vector<8x128xf32>
    %98 = arith.maximumf %96, %97 : vector<8x128xf32>
    %99 = arith.truncf %98 : vector<8x128xf32> to vector<8x128xbf16>
    %c9 = arith.constant 9 : index
    %c0_70 = arith.constant 0 : index
    %c0_71 = arith.constant 0 : index
    %100 = vector.load %arg4[%c9, %c0_70, %c0_71] : memref<10x128x128xbf16, #tpu.memory_space<vmem>>, vector<1x128x128xbf16>
    %101 = vector.shape_cast %100 : vector<1x128x128xbf16> to vector<128x128xbf16>
    %cst_72 = arith.constant dense<0.000000e+00> : vector<8x128xf32>
    %102 = tpu.matmul %99, %101, %cst_72 {dimension_numbers = #tpu.dot_dimension_numbers<[1], [0], [0], [1], [0, 0, 1, 1], [], []>} : vector<8x128xbf16>, vector<128x128xbf16>, vector<8x128xf32> -> vector<8x128xf32>
    %c9_73 = arith.constant 9 : index
    %c0_74 = arith.constant 0 : index
    %c0_75 = arith.constant 0 : index
    %103 = vector.load %arg5[%c9_73, %c0_74, %c0_75] : memref<10x1x128xf32, #tpu.memory_space<vmem>>, vector<1x1x128xf32>
    %104 = vector.shape_cast %103 : vector<1x1x128xf32> to vector<1x128xf32>
    %105 = vector.broadcast %104 : vector<1x128xf32> to vector<8x128xf32>
    %106 = arith.addf %102, %105 : vector<8x128xf32>
    %cst_76 = arith.constant 0.000000e+00 : f32
    %107 = vector.broadcast %cst_76 : f32 to vector<8x128xf32>
    %108 = arith.maximumf %106, %107 : vector<8x128xf32>
    %109 = arith.truncf %108 : vector<8x128xf32> to vector<8x128xbf16>
    %c0_77 = arith.constant 0 : index
    %c0_78 = arith.constant 0 : index
    %110 = vector.load %arg6[%c0_77, %c0_78] : memref<128x128xbf16, #tpu.memory_space<vmem>>, vector<128x128xbf16>
    %cst_79 = arith.constant dense<0.000000e+00> : vector<8x128xf32>
    %111 = tpu.matmul %109, %110, %cst_79 {dimension_numbers = #tpu.dot_dimension_numbers<[1], [0], [0], [1], [0, 0, 1, 1], [], []>} : vector<8x128xbf16>, vector<128x128xbf16>, vector<8x128xf32> -> vector<8x128xf32>
    %c0_80 = arith.constant 0 : index
    %c0_81 = arith.constant 0 : index
    %112 = vector.load %arg7[%c0_80, %c0_81] : memref<1x128xf32, #tpu.memory_space<vmem>>, vector<1x128xf32>
    %113 = vector.broadcast %112 : vector<1x128xf32> to vector<8x128xf32>
    %114 = arith.addf %111, %113 : vector<8x128xf32>
    %c0_82 = arith.constant 0 : index
    %c0_83 = arith.constant 0 : index
    %115 = vector.load %arg8[%c0_82, %c0_83] : memref<8x128xf32, #tpu.memory_space<vmem>>, vector<8x128xf32>
    tpu.vector_store %arg8[%c0_82, %c0_83], %114 {strides = array<i32>} : memref<8x128xf32, #tpu.memory_space<vmem>>, vector<8x128xf32>,
    return
  }
  func.func @transform_0(%arg0: i32) -> (i32, i32) {
    %c0_i32 = arith.constant 0 : i32
    %c0_i32_0 = arith.constant 0 : i32
    return %arg0, %c0_i32 : i32, i32
  }
  func.func @transform_1(%arg0: i32) -> (i32, i32) {
    %c0_i32 = arith.constant 0 : i32
    %c0_i32_0 = arith.constant 0 : i32
    %c0_i32_1 = arith.constant 0 : i32
    return %c0_i32, %c0_i32_0 : i32, i32
  }
  func.func @transform_2(%arg0: i32) -> (i32, i32) {
    %c0_i32 = arith.constant 0 : i32
    %c0_i32_0 = arith.constant 0 : i32
    %c0_i32_1 = arith.constant 0 : i32
    return %c0_i32, %c0_i32_0 : i32, i32
  }
  func.func @transform_3(%arg0: i32) -> (i32, i32, i32) {
    %c0_i32 = arith.constant 0 : i32
    %c0_i32_0 = arith.constant 0 : i32
    %c0_i32_1 = arith.constant 0 : i32
    %c0_i32_2 = arith.constant 0 : i32
    return %c0_i32, %c0_i32_0, %c0_i32_1 : i32, i32, i32
  }
  func.func @transform_4(%arg0: i32) -> (i32, i32, i32) {
    %c0_i32 = arith.constant 0 : i32
    %c0_i32_0 = arith.constant 0 : i32
    %c0_i32_1 = arith.constant 0 : i32
    %c0_i32_2 = arith.constant 0 : i32
    return %c0_i32, %c0_i32_0, %c0_i32_1 : i32, i32, i32
  }
  func.func @transform_5(%arg0: i32) -> (i32, i32) {
    %c0_i32 = arith.constant 0 : i32
    %c0_i32_0 = arith.constant 0 : i32
    %c0_i32_1 = arith.constant 0 : i32
    return %c0_i32, %c0_i32_0 : i32, i32
  }
  func.func @transform_6(%arg0: i32) -> (i32, i32) {
    %c0_i32 = arith.constant 0 : i32
    %c0_i32_0 = arith.constant 0 : i32
    %c0_i32_1 = arith.constant 0 : i32
    return %c0_i32, %c0_i32_0 : i32, i32
  }
  func.func @transform_7(%arg0: i32) -> (i32, i32) {
    %c0_i32 = arith.constant 0 : i32
    %c0_i32_0 = arith.constant 0 : i32
    return %arg0, %c0_i32 : i32, i32
  }
}

</mosaic_0001>

<llo_original>
// kernel: pinn_forward.1
$region0: #{pinn_forward.1}
  #allocation0 [shape = 'u32[]', space=smem, size = 0x4, offset = 0x4, fixed_abs, tag = 'smem constant byte address 0x4 - core index']
  #allocation1 [shape = 'u32[144,128]{1,0:T(1,128)}', space=vmem, size = 0x12000, scoped, tag = 'internal scratch']
  %s0 = inlined_call_operand.vmem [shape: f32[8,128], index: 0, kind: input, shape index: {}]
  %s1 = inlined_call_operand.hbm [shape: bf16[128,128], index: 1, kind: input, shape index: {}]
  %s2 = inlined_call_operand.vmem [shape: f32[1,128], index: 2, kind: input, shape index: {}]
  %s3 = inlined_call_operand.hbm [shape: bf16[10,128,128], index: 3, kind: input, shape index: {}]
  %s4 = inlined_call_operand.vmem [shape: f32[10,1,128], index: 4, kind: input, shape index: {}]
  %s5 = inlined_call_operand.hbm [shape: bf16[128,128], index: 5, kind: input, shape index: {}]
  %s6 = inlined_call_operand.vmem [shape: f32[1,128], index: 6, kind: input, shape index: {}]
  %s7 = inlined_call_operand.hbm [shape: f32[8,128], index: 7, kind: output, shape index: {}]
  %s8 = sld [smem:[#allocation0]]
  $region50: #{pinn_forward.1} parent=0
    _
  %s10 = ssub.s32 1, %s8
  %s11 = scalar_select 0, %s10, %s8
  $region1: #{pinn_forward.1} parent=0
    #allocation2 [shape = 'u8[32768]{0}', space=vmem, size = 0x8000, scoped, tag = 'input window, operand 1, single buffered']
    #allocation3 [shape = 's32[1]{0}', space=sflag, size = 0x4, scoped, tag = 'scoped memory for pinn_forward.1']
    #allocation4 [shape = 's32[1]{0}', space=sflag, size = 0x4, scoped, tag = 'scoped memory for pinn_forward.1']
    #allocation5 [shape = 'u8[327680]{0}', space=vmem, size = 0x50000, scoped, tag = 'input window, operand 3, single buffered']
    #allocation6 [shape = 's32[1]{0}', space=sflag, size = 0x4, scoped, tag = 'scoped memory for pinn_forward.1']
    #allocation7 [shape = 'u8[32768]{0}', space=vmem, size = 0x8000, scoped, tag = 'input window, operand 5, single buffered']
    #allocation8 [shape = 'u8[4096]{0}', space=vmem, size = 0x1000, scoped, tag = 'output window, operand 0, single buffered']
    %12 = vsyncpa [#allocation3], 0
    %13 = vsyncpa [#allocation6], 0
    %14 = vsyncpa [#allocation4], 0
    // Predicated region
    $region2: #{pinn_forward.1} parent=1 // pred_check
      _
    $region3: #{pinn_forward.1} parent=1 // pred_check_branch
      %16 = sbr.rel (0) target = $region5
    $region4: #{pinn_forward.1} parent=1 // pred_region
      _
    $region5: #{pinn_forward.1} parent=1 // pred_fallthru
      _
    // Predicated region
    $region6: #{pinn_forward.1} parent=1 // pred_check
      _
    $region7: #{pinn_forward.1} parent=1 // pred_check_branch
      %18 = sbr.rel (0) target = $region9
    $region8: #{pinn_forward.1} parent=1 // pred_region
      %s20 = ssub.s32 1024, 1024
      %21 = vsyncadd [#allocation3], %s20
      %s22 = sshll.u32 [#allocation2], 4
      %s23 = int_to_ptr.vmem [resolvable:$true] %s22
      %28 = dma.hbm_to_vmem [thread:$0]  %s1, 1024, %s23, [#allocation3], 64, 64, 4
    $region9: #{pinn_forward.1} parent=1 // pred_fallthru
      _
    // Predicated region
    $region10: #{pinn_forward.1} parent=1 // pred_check
      _
    $region11: #{pinn_forward.1} parent=1 // pred_check_branch
      %30 = sbr.rel (0) target = $region13
    $region12: #{pinn_forward.1} parent=1 // pred_region
      _
    $region13: #{pinn_forward.1} parent=1 // pred_fallthru
      _
    // Predicated region
    $region14: #{pinn_forward.1} parent=1 // pred_check
      _
    $region15: #{pinn_forward.1} parent=1 // pred_check_branch
      %32 = sbr.rel (0) target = $region17
    $region16: #{pinn_forward.1} parent=1 // pred_region
      %s34 = ssub.s32 10240, 10240
      %35 = vsyncadd [#allocation6], %s34
      %s36 = sshll.u32 [#allocation5], 4
      %s37 = int_to_ptr.vmem [resolvable:$true] %s36
      %42 = dma.hbm_to_vmem [thread:$0]  %s3, 10240, %s37, [#allocation6], 64, 64, 4
    $region17: #{pinn_forward.1} parent=1 // pred_fallthru
      _
    // Predicated region
    $region18: #{pinn_forward.1} parent=1 // pred_check
      _
    $region19: #{pinn_forward.1} parent=1 // pred_check_branch
      %44 = sbr.rel (0) target = $region21
    $region20: #{pinn_forward.1} parent=1 // pred_region
      _
    $region21: #{pinn_forward.1} parent=1 // pred_fallthru
      _
    // Predicated region
    $region22: #{pinn_forward.1} parent=1 // pred_check
      _
    $region23: #{pinn_forward.1} parent=1 // pred_check_branch
      %46 = sbr.rel (0) target = $region25
    $region24: #{pinn_forward.1} parent=1 // pred_region
      %s48 = ssub.s32 1024, 1024
      %49 = vsyncadd [#allocation6], %s48
      %s50 = sshll.u32 [#allocation7], 4
      %s51 = int_to_ptr.vmem [resolvable:$true] %s50
      %56 = dma.hbm_to_vmem [thread:$0]  %s5, 1024, %s51, [#allocation6], 64, 64, 4
    $region25: #{pinn_forward.1} parent=1 // pred_fallthru
      _
    // Predicated region
    $region26: #{pinn_forward.1} parent=1 // pred_check
      _
    $region27: #{pinn_forward.1} parent=1 // pred_check_branch
      %58 = sbr.rel (0) target = $region29
    $region28: #{pinn_forward.1} parent=1 // pred_region
      _
    $region29: #{pinn_forward.1} parent=1 // pred_fallthru
      _
    // Predicated region
    $region30: #{pinn_forward.1} parent=1 // pred_check
      _
    $region31: #{pinn_forward.1} parent=1 // pred_check_branch
      %60 = sbr.rel (0) target = $region33
    $region32: #{pinn_forward.1} parent=1 // pred_region
      %61 = dma.done [#allocation3], 1024
    $region33: #{pinn_forward.1} parent=1 // pred_fallthru
      _
    // Predicated region
    $region34: #{pinn_forward.1} parent=1 // pred_check
      _
    $region35: #{pinn_forward.1} parent=1 // pred_check_branch
      %63 = sbr.rel (0) target = $region37
    $region36: #{pinn_forward.1} parent=1 // pred_region
      %64 = dma.done [#allocation6], 10240
    $region37: #{pinn_forward.1} parent=1 // pred_fallthru
      _
    // Predicated region
    $region38: #{pinn_forward.1} parent=1 // pred_check
      _
    $region39: #{pinn_forward.1} parent=1 // pred_check_branch
      %66 = sbr.rel (0) target = $region41
    $region40: #{pinn_forward.1} parent=1 // pred_region
      %67 = dma.done [#allocation6], 1024
    $region41: #{pinn_forward.1} parent=1 // pred_fallthru
      _
    %v69 = vld [vmem:[%s0] sm:$0xff]
    %v70 = vpack.c.bf16 %v69, %v69
    %v71 = vld [vmem:[#allocation2] sm:$0xf]
    %v72 = vld [vmem:[#allocation2 + $0x4] sm:$0xf]
    %v73 = vld [vmem:[#allocation2 + $0x8] sm:$0xf]
    %v74 = vld [vmem:[#allocation2 + $0xc] sm:$0xf]
    %v75 = vld [vmem:[#allocation2 + $0x10] sm:$0xf]
    %v76 = vld [vmem:[#allocation2 + $0x14] sm:$0xf]
    %v77 = vld [vmem:[#allocation2 + $0x18] sm:$0xf]
    %v78 = vld [vmem:[#allocation2 + $0x1c] sm:$0xf]
    %v79 = vld [vmem:[#allocation2 + $0x20] sm:$0xf]
    %v80 = vld [vmem:[#allocation2 + $0x24] sm:$0xf]
    %v81 = vld [vmem:[#allocation2 + $0x28] sm:$0xf]
    %v82 = vld [vmem:[#allocation2 + $0x2c] sm:$0xf]
    %v83 = vld [vmem:[#allocation2 + $0x30] sm:$0xf]
    %v84 = vld [vmem:[#allocation2 + $0x34] sm:$0xf]
    %v85 = vld [vmem:[#allocation2 + $0x38] sm:$0xf]
    %v86 = vld [vmem:[#allocation2 + $0x3c] sm:$0xf]
    %v87 = vld [vmem:[%s2] sm:$0x1]
    %v89 = vlaneseq
    %v90 = vshrl.u32 %v89, 7
    %v91 = vsub.s32 0, %v90
    %v92 = vrot.slane %v87, %v91
    %v110 = vunpack.c.l.b16 %v71
    %v111 = vunpack.c.l.b16 %v72
    %v112 = vunpack.c.l.b16 %v73
    %v113 = vunpack.c.l.b16 %v74
    %v114 = vunpack.c.l.b16 %v75
    %v115 = vunpack.c.l.b16 %v76
    %v116 = vunpack.c.l.b16 %v77
    %v117 = vunpack.c.l.b16 %v78
    %v118 = vunpack.c.l.b16 %v79
    %v119 = vunpack.c.l.b16 %v80
    %v120 = vunpack.c.l.b16 %v81
    %v121 = vunpack.c.l.b16 %v82
    %v122 = vunpack.c.l.b16 %v83
    %v123 = vunpack.c.l.b16 %v84
    %v124 = vunpack.c.l.b16 %v85
    %v125 = vunpack.c.l.b16 %v86
    %v126 = vpack.c.b16 %v111, %v110
    %v127 = vpack.c.b16 %v113, %v112
    %v128 = vpack.c.b16 %v115, %v114
    %v129 = vpack.c.b16 %v117, %v116
    %v130 = vpack.c.b16 %v119, %v118
    %v131 = vpack.c.b16 %v121, %v120
    %v132 = vpack.c.b16 %v123, %v122
    %v133 = vpack.c.b16 %v125, %v124
    %142 = vmatprep.subr.bf16.mxu0 0
    %143 = vmatpush1.bf16.msra.mxu0 %v126
    %144 = vmatprep.subr.bf16.mxu0 0
    %145 = vmatpush1.bf16.msra.mxu0 %v127
    %146 = vmatprep.subr.bf16.mxu0 0
    %147 = vmatpush1.bf16.msra.mxu0 %v128
    %148 = vmatprep.subr.bf16.mxu0 0
    %149 = vmatpush1.bf16.msra.mxu0 %v129
    %150 = vmatprep.subr.bf16.mxu0 0
    %151 = vmatpush1.bf16.msra.mxu0 %v130
    %152 = vmatprep.subr.bf16.mxu0 0
    %153 = vmatpush1.bf16.msra.mxu0 %v131
    %154 = vmatprep.subr.bf16.mxu0 0
    %155 = vmatpush1.bf16.msra.mxu0 %v132
    %156 = vmatprep.subr.bf16.mxu0 0
    %157 = vmatpush1.bf16.msra.mxu0 %v133
    %158 = vmatprep.subr.bf16.mxu0 0
    %159 = vmatpush1.bf16.msra.mxu0 0
    %160 = vmatprep.subr.bf16.mxu0 0
    %161 = vmatpush1.bf16.msra.mxu0 0
    %162 = vmatprep.subr.bf16.mxu0 0
    %163 = vmatpush1.bf16.msra.mxu0 0
    %164 = vmatprep.subr.bf16.mxu0 0
    %165 = vmatpush1.bf16.msra.mxu0 0
    %166 = vmatprep.subr.bf16.mxu0 0
    %167 = vmatpush1.bf16.msra.mxu0 0
    %168 = vmatprep.subr.bf16.mxu0 0
    %169 = vmatpush1.bf16.msra.mxu0 0
    %170 = vmatprep.subr.bf16.mxu0 0
    %171 = vmatpush1.bf16.msra.mxu0 0
    %172 = vmatprep.subr.bf16.mxu0 0
    %173 = vmatpush1.bf16.msra.mxu0 0
    %174 = vmatprep.mubr.bf16.mxu0 0
    %175 = vmatmul.mubr.bf16.gmra.mrb[0].mxu0 %v70
    %v176 = vpop.f32.mrb[0].mxu0
    %v177 = vadd.f32 %v92, %v176
    %v178 = vpop.f32.mrb[0].mxu0
    %v179 = vpop.f32.mrb[0].mxu0
    %v180 = vpop.f32.mrb[0].mxu0
    %181 = vdwg.mxu0
    %v182 = vmax.f32 %v177, 0.0
    %v183 = vpack.c.bf16 %v182, %v182
    %v184 = vld [vmem:[#allocation5] sm:$0xf]
    %v185 = vld [vmem:[#allocation5 + $0x4] sm:$0xf]
    %v186 = vld [vmem:[#allocation5 + $0x8] sm:$0xf]
    %v187 = vld [vmem:[#allocation5 + $0xc] sm:$0xf]
    %v188 = vld [vmem:[#allocation5 + $0x10] sm:$0xf]
    %v189 = vld [vmem:[#allocation5 + $0x14] sm:$0xf]
    %v190 = vld [vmem:[#allocation5 + $0x18] sm:$0xf]
    %v191 = vld [vmem:[#allocation5 + $0x1c] sm:$0xf]
    %v192 = vld [vmem:[#allocation5 + $0x20] sm:$0xf]
    %v193 = vld [vmem:[#allocation5 + $0x24] sm:$0xf]
    %v194 = vld [vmem:[#allocation5 + $0x28] sm:$0xf]
    %v195 = vld [vmem:[#allocation5 + $0x2c] sm:$0xf]
    %v196 = vld [vmem:[#allocation5 + $0x30] sm:$0xf]
    %v197 = vld [vmem:[#allocation5 + $0x34] sm:$0xf]
    %v198 = vld [vmem:[#allocation5 + $0x38] sm:$0xf]
    %v199 = vld [vmem:[#allocation5 + $0x3c] sm:$0xf]
    %v200 = vld [vmem:[%s4] sm:$0x1]
    %v202 = vlaneseq
    %v203 = vshrl.u32 %v202, 7
    %v204 = vsub.s32 0, %v203
    %v205 = vrot.slane %v200, %v204
    %v223 = vunpack.c.l.b16 %v184
    %v224 = vunpack.c.l.b16 %v185
    %v225 = vunpack.c.l.b16 %v186
    %v226 = vunpack.c.l.b16 %v187
    %v227 = vunpack.c.l.b16 %v188
    %v228 = vunpack.c.l.b16 %v189
    %v229 = vunpack.c.l.b16 %v190
    %v230 = vunpack.c.l.b16 %v191
    %v231 = vunpack.c.l.b16 %v192
    %v232 = vunpack.c.l.b16 %v193
    %v233 = vunpack.c.l.b16 %v194
    %v234 = vunpack.c.l.b16 %v195
    %v235 = vunpack.c.l.b16 %v196
    %v236 = vunpack.c.l.b16 %v197
    %v237 = vunpack.c.l.b16 %v198
    %v238 = vunpack.c.l.b16 %v199
    %v239 = vpack.c.b16 %v224, %v223
    %v240 = vpack.c.b16 %v226, %v225
    %v241 = vpack.c.b16 %v228, %v227
    %v242 = vpack.c.b16 %v230, %v229
    %v243 = vpack.c.b16 %v232, %v231
    %v244 = vpack.c.b16 %v234, %v233
    %v245 = vpack.c.b16 %v236, %v235
    %v246 = vpack.c.b16 %v238, %v237
    %255 = vmatprep.subr.bf16.mxu0 0
    %256 = vmatpush1.bf16.msra.mxu0 %v239
    %257 = vmatprep.subr.bf16.mxu0 0
    %258 = vmatpush1.bf16.msra.mxu0 %v240
    %259 = vmatprep.subr.bf16.mxu0 0
    %260 = vmatpush1.bf16.msra.mxu0 %v241
    %261 = vmatprep.subr.bf16.mxu0 0
    %262 = vmatpush1.bf16.msra.mxu0 %v242
    %263 = vmatprep.subr.bf16.mxu0 0
    %264 = vmatpush1.bf16.msra.mxu0 %v243
    %265 = vmatprep.subr.bf16.mxu0 0
    %266 = vmatpush1.bf16.msra.mxu0 %v244
    %267 = vmatprep.subr.bf16.mxu0 0
    %268 = vmatpush1.bf16.msra.mxu0 %v245
    %269 = vmatprep.subr.bf16.mxu0 0
    %270 = vmatpush1.bf16.msra.mxu0 %v246
    %271 = vmatprep.subr.bf16.mxu0 0
    %272 = vmatpush1.bf16.msra.mxu0 0
    %273 = vmatprep.subr.bf16.mxu0 0
    %274 = vmatpush1.bf16.msra.mxu0 0
    %275 = vmatprep.subr.bf16.mxu0 0
    %276 = vmatpush1.bf16.msra.mxu0 0
    %277 = vmatprep.subr.bf16.mxu0 0
    %278 = vmatpush1.bf16.msra.mxu0 0
    %279 = vmatprep.subr.bf16.mxu0 0
    %280 = vmatpush1.bf16.msra.mxu0 0
    %281 = vmatprep.subr.bf16.mxu0 0
    %282 = vmatpush1.bf16.msra.mxu0 0
    %283 = vmatprep.subr.bf16.mxu0 0
    %284 = vmatpush1.bf16.msra.mxu0 0
    %285 = vmatprep.subr.bf16.mxu0 0
    %286 = vmatpush1.bf16.msra.mxu0 0
    %287 = vmatprep.mubr.bf16.mxu0 0
    %288 = vmatmul.mubr.bf16.gmra.mrb[0].mxu0 %v183
    %v289 = vpop.f32.mrb[0].mxu0
    %v290 = vadd.f32 %v205, %v289
    %v291 = vpop.f32.mrb[0].mxu0
    %v292 = vpop.f32.mrb[0].mxu0
    %v293 = vpop.f32.mrb[0].mxu0
    %294 = vdwg.mxu0
    %v295 = vmax.f32 %v290, 0.0
    %v296 = vpack.c.bf16 %v295, %v295
    %s297 = scalar_lea.vmem [#allocation5], 64
    %v298 = vld [vmem:[%s297] sm:$0xf]
    %v299 = vld [vmem:[%s297 + $0x4] sm:$0xf]
    %v300 = vld [vmem:[%s297 + $0x8] sm:$0xf]
    %v301 = vld [vmem:[%s297 + $0xc] sm:$0xf]
    %v302 = vld [vmem:[%s297 + $0x10] sm:$0xf]
    %v303 = vld [vmem:[%s297 + $0x14] sm:$0xf]
    %v304 = vld [vmem:[%s297 + $0x18] sm:$0xf]
    %v305 = vld [vmem:[%s297 + $0x1c] sm:$0xf]
    %v306 = vld [vmem:[%s297 + $0x20] sm:$0xf]
    %v307 = vld [vmem:[%s297 + $0x24] sm:$0xf]
    %v308 = vld [vmem:[%s297 + $0x28] sm:$0xf]
    %v309 = vld [vmem:[%s297 + $0x2c] sm:$0xf]
    %v310 = vld [vmem:[%s297 + $0x30] sm:$0xf]
    %v311 = vld [vmem:[%s297 + $0x34] sm:$0xf]
    %v312 = vld [vmem:[%s297 + $0x38] sm:$0xf]
    %v313 = vld [vmem:[%s297 + $0x3c] sm:$0xf]
    %s314 = scalar_lea.vmem %s4, 1
    %v315 = vld [vmem:[%s314] sm:$0x1]
    %v317 = vlaneseq
    %v318 = vshrl.u32 %v317, 7
    %v319 = vsub.s32 0, %v318
    %v320 = vrot.slane %v315, %v319
    %v338 = vunpack.c.l.b16 %v298
    %v339 = vunpack.c.l.b16 %v299
    %v340 = vunpack.c.l.b16 %v300
    %v341 = vunpack.c.l.b16 %v301
    %v342 = vunpack.c.l.b16 %v302
    %v343 = vunpack.c.l.b16 %v303
    %v344 = vunpack.c.l.b16 %v304
    %v345 = vunpack.c.l.b16 %v305
    %v346 = vunpack.c.l.b16 %v306
    %v347 = vunpack.c.l.b16 %v307
    %v348 = vunpack.c.l.b16 %v308
    %v349 = vunpack.c.l.b16 %v309
    %v350 = vunpack.c.l.b16 %v310
    %v351 = vunpack.c.l.b16 %v311
    %v352 = vunpack.c.l.b16 %v312
    %v353 = vunpack.c.l.b16 %v313
    %v354 = vpack.c.b16 %v339, %v338
    %v355 = vpack.c.b16 %v341, %v340
    %v356 = vpack.c.b16 %v343, %v342
    %v357 = vpack.c.b16 %v345, %v344
    %v358 = vpack.c.b16 %v347, %v346
    %v359 = vpack.c.b16 %v349, %v348
    %v360 = vpack.c.b16 %v351, %v350
    %v361 = vpack.c.b16 %v353, %v352
    %370 = vmatprep.subr.bf16.mxu0 0
    %371 = vmatpush1.bf16.msra.mxu0 %v354
    %372 = vmatprep.subr.bf16.mxu0 0
    %373 = vmatpush1.bf16.msra.mxu0 %v355
    %374 = vmatprep.subr.bf16.mxu0 0
    %375 = vmatpush1.bf16.msra.mxu0 %v356
    %376 = vmatprep.subr.bf16.mxu0 0
    %377 = vmatpush1.bf16.msra.mxu0 %v357
    %378 = vmatprep.subr.bf16.mxu0 0
    %379 = vmatpush1.bf16.msra.mxu0 %v358
    %380 = vmatprep.subr.bf16.mxu0 0
    %381 = vmatpush1.bf16.msra.mxu0 %v359
    %382 = vmatprep.subr.bf16.mxu0 0
    %383 = vmatpush1.bf16.msra.mxu0 %v360
    %384 = vmatprep.subr.bf16.mxu0 0
    %385 = vmatpush1.bf16.msra.mxu0 %v361
    %386 = vmatprep.subr.bf16.mxu0 0
    %387 = vmatpush1.bf16.msra.mxu0 0
    %388 = vmatprep.subr.bf16.mxu0 0
    %389 = vmatpush1.bf16.msra.mxu0 0
    %390 = vmatprep.subr.bf16.mxu0 0
    %391 = vmatpush1.bf16.msra.mxu0 0
    %392 = vmatprep.subr.bf16.mxu0 0
    %393 = vmatpush1.bf16.msra.mxu0 0
    %394 = vmatprep.subr.bf16.mxu0 0
    %395 = vmatpush1.bf16.msra.mxu0 0
    %396 = vmatprep.subr.bf16.mxu0 0
    %397 = vmatpush1.bf16.msra.mxu0 0
    %398 = vmatprep.subr.bf16.mxu0 0
    %399 = vmatpush1.bf16.msra.mxu0 0
    %400 = vmatprep.subr.bf16.mxu0 0
    %401 = vmatpush1.bf16.msra.mxu0 0
    %402 = vmatprep.mubr.bf16.mxu0 0
    %403 = vmatmul.mubr.bf16.gmra.mrb[0].mxu0 %v296
    %v404 = vpop.f32.mrb[0].mxu0
    %v405 = vadd.f32 %v320, %v404
    %v406 = vpop.f32.mrb[0].mxu0
    %v407 = vpop.f32.mrb[0].mxu0
    %v408 = vpop.f32.mrb[0].mxu0
    %409 = vdwg.mxu0
    %v410 = vmax.f32 %v405, 0.0
    %v411 = vpack.c.bf16 %v410, %v410
    %s412 = scalar_lea.vmem [#allocation5], 128
    %v413 = vld [vmem:[%s412] sm:$0xf]
    %v414 = vld [vmem:[%s412 + $0x4] sm:$0xf]
    %v415 = vld [vmem:[%s412 + $0x8] sm:$0xf]
    %v416 = vld [vmem:[%s412 + $0xc] sm:$0xf]
    %v417 = vld [vmem:[%s412 + $0x10] sm:$0xf]
    %v418 = vld [vmem:[%s412 + $0x14] sm:$0xf]
    %v419 = vld [vmem:[%s412 + $0x18] sm:$0xf]
    %v420 = vld [vmem:[%s412 + $0x1c] sm:$0xf]
    %v421 = vld [vmem:[%s412 + $0x20] sm:$0xf]
    %v422 = vld [vmem:[%s412 + $0x24] sm:$0xf]
    %v423 = vld [vmem:[%s412 + $0x28] sm:$0xf]
    %v424 = vld [vmem:[%s412 + $0x2c] sm:$0xf]
    %v425 = vld [vmem:[%s412 + $0x30] sm:$0xf]
    %v426 = vld [vmem:[%s412 + $0x34] sm:$0xf]
    %v427 = vld [vmem:[%s412 + $0x38] sm:$0xf]
    %v428 = vld [vmem:[%s412 + $0x3c] sm:$0xf]
    %s429 = scalar_lea.vmem %s4, 2
    %v430 = vld [vmem:[%s429] sm:$0x1]
    %v432 = vlaneseq
    %v433 = vshrl.u32 %v432, 7
    %v434 = vsub.s32 0, %v433
    %v435 = vrot.slane %v430, %v434
    %v453 = vunpack.c.l.b16 %v413
    %v454 = vunpack.c.l.b16 %v414
    %v455 = vunpack.c.l.b16 %v415
    %v456 = vunpack.c.l.b16 %v416
    %v457 = vunpack.c.l.b16 %v417
    %v458 = vunpack.c.l.b16 %v418
    %v459 = vunpack.c.l.b16 %v419
    %v460 = vunpack.c.l.b16 %v420
    %v461 = vunpack.c.l.b16 %v421
    %v462 = vunpack.c.l.b16 %v422
    %v463 = vunpack.c.l.b16 %v423
    %v464 = vunpack.c.l.b16 %v424
    %v465 = vunpack.c.l.b16 %v425
    %v466 = vunpack.c.l.b16 %v426
    %v467 = vunpack.c.l.b16 %v427
    %v468 = vunpack.c.l.b16 %v428
    %v469 = vpack.c.b16 %v454, %v453
    %v470 = vpack.c.b16 %v456, %v455
    %v471 = vpack.c.b16 %v458, %v457
    %v472 = vpack.c.b16 %v460, %v459
    %v473 = vpack.c.b16 %v462, %v461
    %v474 = vpack.c.b16 %v464, %v463
    %v475 = vpack.c.b16 %v466, %v465
    %v476 = vpack.c.b16 %v468, %v467
    %485 = vmatprep.subr.bf16.mxu0 0
    %486 = vmatpush1.bf16.msra.mxu0 %v469
    %487 = vmatprep.subr.bf16.mxu0 0
    %488 = vmatpush1.bf16.msra.mxu0 %v470
    %489 = vmatprep.subr.bf16.mxu0 0
    %490 = vmatpush1.bf16.msra.mxu0 %v471
    %491 = vmatprep.subr.bf16.mxu0 0
    %492 = vmatpush1.bf16.msra.mxu0 %v472
    %493 = vmatprep.subr.bf16.mxu0 0
    %494 = vmatpush1.bf16.msra.mxu0 %v473
    %495 = vmatprep.subr.bf16.mxu0 0
    %496 = vmatpush1.bf16.msra.mxu0 %v474
    %497 = vmatprep.subr.bf16.mxu0 0
    %498 = vmatpush1.bf16.msra.mxu0 %v475
    %499 = vmatprep.subr.bf16.mxu0 0
    %500 = vmatpush1.bf16.msra.mxu0 %v476
    %501 = vmatprep.subr.bf16.mxu0 0
    %502 = vmatpush1.bf16.msra.mxu0 0
    %503 = vmatprep.subr.bf16.mxu0 0
    %504 = vmatpush1.bf16.msra.mxu0 0
    %505 = vmatprep.subr.bf16.mxu0 0
    %506 = vmatpush1.bf16.msra.mxu0 0
    %507 = vmatprep.subr.bf16.mxu0 0
    %508 = vmatpush1.bf16.msra.mxu0 0
    %509 = vmatprep.subr.bf16.mxu0 0
    %510 = vmatpush1.bf16.msra.mxu0 0
    %511 = vmatprep.subr.bf16.mxu0 0
    %512 = vmatpush1.bf16.msra.mxu0 0
    %513 = vmatprep.subr.bf16.mxu0 0
    %514 = vmatpush1.bf16.msra.mxu0 0
    %515 = vmatprep.subr.bf16.mxu0 0
    %516 = vmatpush1.bf16.msra.mxu0 0
    %517 = vmatprep.mubr.bf16.mxu0 0
    %518 = vmatmul.mubr.bf16.gmra.mrb[0].mxu0 %v411
    %v519 = vpop.f32.mrb[0].mxu0
    %v520 = vadd.f32 %v435, %v519
    %v521 = vpop.f32.mrb[0].mxu0
    %v522 = vpop.f32.mrb[0].mxu0
    %v523 = vpop.f32.mrb[0].mxu0
    %524 = vdwg.mxu0
    %v525 = vmax.f32 %v520, 0.0
    %v526 = vpack.c.bf16 %v525, %v525
    %s527 = scalar_lea.vmem [#allocation5], 192
    %v528 = vld [vmem:[%s527] sm:$0xf]
    %v529 = vld [vmem:[%s527 + $0x4] sm:$0xf]
    %v530 = vld [vmem:[%s527 + $0x8] sm:$0xf]
    %v531 = vld [vmem:[%s527 + $0xc] sm:$0xf]
    %v532 = vld [vmem:[%s527 + $0x10] sm:$0xf]
    %v533 = vld [vmem:[%s527 + $0x14] sm:$0xf]
    %v534 = vld [vmem:[%s527 + $0x18] sm:$0xf]
    %v535 = vld [vmem:[%s527 + $0x1c] sm:$0xf]
    %v536 = vld [vmem:[%s527 + $0x20] sm:$0xf]
    %v537 = vld [vmem:[%s527 + $0x24] sm:$0xf]
    %v538 = vld [vmem:[%s527 + $0x28] sm:$0xf]
    %v539 = vld [vmem:[%s527 + $0x2c] sm:$0xf]
    %v540 = vld [vmem:[%s527 + $0x30] sm:$0xf]
    %v541 = vld [vmem:[%s527 + $0x34] sm:$0xf]
    %v542 = vld [vmem:[%s527 + $0x38] sm:$0xf]
    %v543 = vld [vmem:[%s527 + $0x3c] sm:$0xf]
    %s544 = scalar_lea.vmem %s4, 3
    %v545 = vld [vmem:[%s544] sm:$0x1]
    %v547 = vlaneseq
    %v548 = vshrl.u32 %v547, 7
    %v549 = vsub.s32 0, %v548
    %v550 = vrot.slane %v545, %v549
    %v568 = vunpack.c.l.b16 %v528
    %v569 = vunpack.c.l.b16 %v529
    %v570 = vunpack.c.l.b16 %v530
    %v571 = vunpack.c.l.b16 %v531
    %v572 = vunpack.c.l.b16 %v532
    %v573 = vunpack.c.l.b16 %v533
    %v574 = vunpack.c.l.b16 %v534
    %v575 = vunpack.c.l.b16 %v535
    %v576 = vunpack.c.l.b16 %v536
    %v577 = vunpack.c.l.b16 %v537
    %v578 = vunpack.c.l.b16 %v538
    %v579 = vunpack.c.l.b16 %v539
    %v580 = vunpack.c.l.b16 %v540
    %v581 = vunpack.c.l.b16 %v541
    %v582 = vunpack.c.l.b16 %v542
    %v583 = vunpack.c.l.b16 %v543
    %v584 = vpack.c.b16 %v569, %v568
    %v585 = vpack.c.b16 %v571, %v570
    %v586 = vpack.c.b16 %v573, %v572
    %v587 = vpack.c.b16 %v575, %v574
    %v588 = vpack.c.b16 %v577, %v576
    %v589 = vpack.c.b16 %v579, %v578
    %v590 = vpack.c.b16 %v581, %v580
    %v591 = vpack.c.b16 %v583, %v582
    %600 = vmatprep.subr.bf16.mxu0 0
    %601 = vmatpush1.bf16.msra.mxu0 %v584
    %602 = vmatprep.subr.bf16.mxu0 0
    %603 = vmatpush1.bf16.msra.mxu0 %v585
    %604 = vmatprep.subr.bf16.mxu0 0
    %605 = vmatpush1.bf16.msra.mxu0 %v586
    %606 = vmatprep.subr.bf16.mxu0 0
    %607 = vmatpush1.bf16.msra.mxu0 %v587
    %608 = vmatprep.subr.bf16.mxu0 0
    %609 = vmatpush1.bf16.msra.mxu0 %v588
    %610 = vmatprep.subr.bf16.mxu0 0
    %611 = vmatpush1.bf16.msra.mxu0 %v589
    %612 = vmatprep.subr.bf16.mxu0 0
    %613 = vmatpush1.bf16.msra.mxu0 %v590
    %614 = vmatprep.subr.bf16.mxu0 0
    %615 = vmatpush1.bf16.msra.mxu0 %v591
    %616 = vmatprep.subr.bf16.mxu0 0
    %617 = vmatpush1.bf16.msra.mxu0 0
    %618 = vmatprep.subr.bf16.mxu0 0
    %619 = vmatpush1.bf16.msra.mxu0 0
    %620 = vmatprep.subr.bf16.mxu0 0
    %621 = vmatpush1.bf16.msra.mxu0 0
    %622 = vmatprep.subr.bf16.mxu0 0
    %623 = vmatpush1.bf16.msra.mxu0 0
    %624 = vmatprep.subr.bf16.mxu0 0
    %625 = vmatpush1.bf16.msra.mxu0 0
    %626 = vmatprep.subr.bf16.mxu0 0
    %627 = vmatpush1.bf16.msra.mxu0 0
    %628 = vmatprep.subr.bf16.mxu0 0
    %629 = vmatpush1.bf16.msra.mxu0 0
    %630 = vmatprep.subr.bf16.mxu0 0
    %631 = vmatpush1.bf16.msra.mxu0 0
    %632 = vmatprep.mubr.bf16.mxu0 0
    %633 = vmatmul.mubr.bf16.gmra.mrb[0].mxu0 %v526
    %v634 = vpop.f32.mrb[0].mxu0
    %v635 = vadd.f32 %v550, %v634
    %v636 = vpop.f32.mrb[0].mxu0
    %v637 = vpop.f32.mrb[0].mxu0
    %v638 = vpop.f32.mrb[0].mxu0
    %639 = vdwg.mxu0
    %v640 = vmax.f32 %v635, 0.0
    %v641 = vpack.c.bf16 %v640, %v640
    %s642 = scalar_lea.vmem [#allocation5], 256
    %v643 = vld [vmem:[%s642] sm:$0xf]
    %v644 = vld [vmem:[%s642 + $0x4] sm:$0xf]
    %v645 = vld [vmem:[%s642 + $0x8] sm:$0xf]
    %v646 = vld [vmem:[%s642 + $0xc] sm:$0xf]
    %v647 = vld [vmem:[%s642 + $0x10] sm:$0xf]
    %v648 = vld [vmem:[%s642 + $0x14] sm:$0xf]
    %v649 = vld [vmem:[%s642 + $0x18] sm:$0xf]
    %v650 = vld [vmem:[%s642 + $0x1c] sm:$0xf]
    %v651 = vld [vmem:[%s642 + $0x20] sm:$0xf]
    %v652 = vld [vmem:[%s642 + $0x24] sm:$0xf]
    %v653 = vld [vmem:[%s642 + $0x28] sm:$0xf]
    %v654 = vld [vmem:[%s642 + $0x2c] sm:$0xf]
    %v655 = vld [vmem:[%s642 + $0x30] sm:$0xf]
    %v656 = vld [vmem:[%s642 + $0x34] sm:$0xf]
    %v657 = vld [vmem:[%s642 + $0x38] sm:$0xf]
    %v658 = vld [vmem:[%s642 + $0x3c] sm:$0xf]
    %s659 = scalar_lea.vmem %s4, 4
    %v660 = vld [vmem:[%s659] sm:$0x1]
    %v662 = vlaneseq
    %v663 = vshrl.u32 %v662, 7
    %v664 = vsub.s32 0, %v663
    %v665 = vrot.slane %v660, %v664
    %v683 = vunpack.c.l.b16 %v643
    %v684 = vunpack.c.l.b16 %v644
    %v685 = vunpack.c.l.b16 %v645
    %v686 = vunpack.c.l.b16 %v646
    %v687 = vunpack.c.l.b16 %v647
    %v688 = vunpack.c.l.b16 %v648
    %v689 = vunpack.c.l.b16 %v649
    %v690 = vunpack.c.l.b16 %v650
    %v691 = vunpack.c.l.b16 %v651
    %v692 = vunpack.c.l.b16 %v652
    %v693 = vunpack.c.l.b16 %v653
    %v694 = vunpack.c.l.b16 %v654
    %v695 = vunpack.c.l.b16 %v655
    %v696 = vunpack.c.l.b16 %v656
    %v697 = vunpack.c.l.b16 %v657
    %v698 = vunpack.c.l.b16 %v658
    %v699 = vpack.c.b16 %v684, %v683
    %v700 = vpack.c.b16 %v686, %v685
    %v701 = vpack.c.b16 %v688, %v687
    %v702 = vpack.c.b16 %v690, %v689
    %v703 = vpack.c.b16 %v692, %v691
    %v704 = vpack.c.b16 %v694, %v693
    %v705 = vpack.c.b16 %v696, %v695
    %v706 = vpack.c.b16 %v698, %v697
    %715 = vmatprep.subr.bf16.mxu0 0
    %716 = vmatpush1.bf16.msra.mxu0 %v699
    %717 = vmatprep.subr.bf16.mxu0 0
    %718 = vmatpush1.bf16.msra.mxu0 %v700
    %719 = vmatprep.subr.bf16.mxu0 0
    %720 = vmatpush1.bf16.msra.mxu0 %v701
    %721 = vmatprep.subr.bf16.mxu0 0
    %722 = vmatpush1.bf16.msra.mxu0 %v702
    %723 = vmatprep.subr.bf16.mxu0 0
    %724 = vmatpush1.bf16.msra.mxu0 %v703
    %725 = vmatprep.subr.bf16.mxu0 0
    %726 = vmatpush1.bf16.msra.mxu0 %v704
    %727 = vmatprep.subr.bf16.mxu0 0
    %728 = vmatpush1.bf16.msra.mxu0 %v705
    %729 = vmatprep.subr.bf16.mxu0 0
    %730 = vmatpush1.bf16.msra.mxu0 %v706
    %731 = vmatprep.subr.bf16.mxu0 0
    %732 = vmatpush1.bf16.msra.mxu0 0
    %733 = vmatprep.subr.bf16.mxu0 0
    %734 = vmatpush1.bf16.msra.mxu0 0
    %735 = vmatprep.subr.bf16.mxu0 0
    %736 = vmatpush1.bf16.msra.mxu0 0
    %737 = vmatprep.subr.bf16.mxu0 0
    %738 = vmatpush1.bf16.msra.mxu0 0
    %739 = vmatprep.subr.bf16.mxu0 0
    %740 = vmatpush1.bf16.msra.mxu0 0
    %741 = vmatprep.subr.bf16.mxu0 0
    %742 = vmatpush1.bf16.msra.mxu0 0
    %743 = vmatprep.subr.bf16.mxu0 0
    %744 = vmatpush1.bf16.msra.mxu0 0
    %745 = vmatprep.subr.bf16.mxu0 0
    %746 = vmatpush1.bf16.msra.mxu0 0
    %747 = vmatprep.mubr.bf16.mxu0 0
    %748 = vmatmul.mubr.bf16.gmra.mrb[0].mxu0 %v641
    %v749 = vpop.f32.mrb[0].mxu0
    %v750 = vadd.f32 %v665, %v749
    %v751 = vpop.f32.mrb[0].mxu0
    %v752 = vpop.f32.mrb[0].mxu0
    %v753 = vpop.f32.mrb[0].mxu0
    %754 = vdwg.mxu0
    %v755 = vmax.f32 %v750, 0.0
    %v756 = vpack.c.bf16 %v755, %v755
    %s757 = scalar_lea.vmem [#allocation5], 320
    %v758 = vld [vmem:[%s757] sm:$0xf]
    %v759 = vld [vmem:[%s757 + $0x4] sm:$0xf]
    %v760 = vld [vmem:[%s757 + $0x8] sm:$0xf]
    %v761 = vld [vmem:[%s757 + $0xc] sm:$0xf]
    %v762 = vld [vmem:[%s757 + $0x10] sm:$0xf]
    %v763 = vld [vmem:[%s757 + $0x14] sm:$0xf]
    %v764 = vld [vmem:[%s757 + $0x18] sm:$0xf]
    %v765 = vld [vmem:[%s757 + $0x1c] sm:$0xf]
    %v766 = vld [vmem:[%s757 + $0x20] sm:$0xf]
    %v767 = vld [vmem:[%s757 + $0x24] sm:$0xf]
    %v768 = vld [vmem:[%s757 + $0x28] sm:$0xf]
    %v769 = vld [vmem:[%s757 + $0x2c] sm:$0xf]
    %v770 = vld [vmem:[%s757 + $0x30] sm:$0xf]
    %v771 = vld [vmem:[%s757 + $0x34] sm:$0xf]
    %v772 = vld [vmem:[%s757 + $0x38] sm:$0xf]
    %v773 = vld [vmem:[%s757 + $0x3c] sm:$0xf]
    %s774 = scalar_lea.vmem %s4, 5
    %v775 = vld [vmem:[%s774] sm:$0x1]
    %v777 = vlaneseq
    %v778 = vshrl.u32 %v777, 7
    %v779 = vsub.s32 0, %v778
    %v780 = vrot.slane %v775, %v779
    %v798 = vunpack.c.l.b16 %v758
    %v799 = vunpack.c.l.b16 %v759
    %v800 = vunpack.c.l.b16 %v760
    %v801 = vunpack.c.l.b16 %v761
    %v802 = vunpack.c.l.b16 %v762
    %v803 = vunpack.c.l.b16 %v763
    %v804 = vunpack.c.l.b16 %v764
    %v805 = vunpack.c.l.b16 %v765
    %v806 = vunpack.c.l.b16 %v766
    %v807 = vunpack.c.l.b16 %v767
    %v808 = vunpack.c.l.b16 %v768
    %v809 = vunpack.c.l.b16 %v769
    %v810 = vunpack.c.l.b16 %v770
    %v811 = vunpack.c.l.b16 %v771
    %v812 = vunpack.c.l.b16 %v772
    %v813 = vunpack.c.l.b16 %v773
    %v814 = vpack.c.b16 %v799, %v798
    %v815 = vpack.c.b16 %v801, %v800
    %v816 = vpack.c.b16 %v803, %v802
    %v817 = vpack.c.b16 %v805, %v804
    %v818 = vpack.c.b16 %v807, %v806
    %v819 = vpack.c.b16 %v809, %v808
    %v820 = vpack.c.b16 %v811, %v810
    %v821 = vpack.c.b16 %v813, %v812
    %830 = vmatprep.subr.bf16.mxu0 0
    %831 = vmatpush1.bf16.msra.mxu0 %v814
    %832 = vmatprep.subr.bf16.mxu0 0
    %833 = vmatpush1.bf16.msra.mxu0 %v815
    %834 = vmatprep.subr.bf16.mxu0 0
    %835 = vmatpush1.bf16.msra.mxu0 %v816
    %836 = vmatprep.subr.bf16.mxu0 0
    %837 = vmatpush1.bf16.msra.mxu0 %v817
    %838 = vmatprep.subr.bf16.mxu0 0
    %839 = vmatpush1.bf16.msra.mxu0 %v818
    %840 = vmatprep.subr.bf16.mxu0 0
    %841 = vmatpush1.bf16.msra.mxu0 %v819
    %842 = vmatprep.subr.bf16.mxu0 0
    %843 = vmatpush1.bf16.msra.mxu0 %v820
    %844 = vmatprep.subr.bf16.mxu0 0
    %845 = vmatpush1.bf16.msra.mxu0 %v821
    %846 = vmatprep.subr.bf16.mxu0 0
    %847 = vmatpush1.bf16.msra.mxu0 0
    %848 = vmatprep.subr.bf16.mxu0 0
    %849 = vmatpush1.bf16.msra.mxu0 0
    %850 = vmatprep.subr.bf16.mxu0 0
    %851 = vmatpush1.bf16.msra.mxu0 0
    %852 = vmatprep.subr.bf16.mxu0 0
    %853 = vmatpush1.bf16.msra.mxu0 0
    %854 = vmatprep.subr.bf16.mxu0 0
    %855 = vmatpush1.bf16.msra.mxu0 0
    %856 = vmatprep.subr.bf16.mxu0 0
    %857 = vmatpush1.bf16.msra.mxu0 0
    %858 = vmatprep.subr.bf16.mxu0 0
    %859 = vmatpush1.bf16.msra.mxu0 0
    %860 = vmatprep.subr.bf16.mxu0 0
    %861 = vmatpush1.bf16.msra.mxu0 0
    %862 = vmatprep.mubr.bf16.mxu0 0
    %863 = vmatmul.mubr.bf16.gmra.mrb[0].mxu0 %v756
    %v864 = vpop.f32.mrb[0].mxu0
    %v865 = vadd.f32 %v780, %v864
    %v866 = vpop.f32.mrb[0].mxu0
    %v867 = vpop.f32.mrb[0].mxu0
    %v868 = vpop.f32.mrb[0].mxu0
    %869 = vdwg.mxu0
    %v870 = vmax.f32 %v865, 0.0
    %v871 = vpack.c.bf16 %v870, %v870
    %s872 = scalar_lea.vmem [#allocation5], 384
    %v873 = vld [vmem:[%s872] sm:$0xf]
    %v874 = vld [vmem:[%s872 + $0x4] sm:$0xf]
    %v875 = vld [vmem:[%s872 + $0x8] sm:$0xf]
    %v876 = vld [vmem:[%s872 + $0xc] sm:$0xf]
    %v877 = vld [vmem:[%s872 + $0x10] sm:$0xf]
    %v878 = vld [vmem:[%s872 + $0x14] sm:$0xf]
    %v879 = vld [vmem:[%s872 + $0x18] sm:$0xf]
    %v880 = vld [vmem:[%s872 + $0x1c] sm:$0xf]
    %v881 = vld [vmem:[%s872 + $0x20] sm:$0xf]
    %v882 = vld [vmem:[%s872 + $0x24] sm:$0xf]
    %v883 = vld [vmem:[%s872 + $0x28] sm:$0xf]
    %v884 = vld [vmem:[%s872 + $0x2c] sm:$0xf]
    %v885 = vld [vmem:[%s872 + $0x30] sm:$0xf]
    %v886 = vld [vmem:[%s872 + $0x34] sm:$0xf]
    %v887 = vld [vmem:[%s872 + $0x38] sm:$0xf]
    %v888 = vld [vmem:[%s872 + $0x3c] sm:$0xf]
    %s889 = scalar_lea.vmem %s4, 6
    %v890 = vld [vmem:[%s889] sm:$0x1]
    %v892 = vlaneseq
    %v893 = vshrl.u32 %v892, 7
    %v894 = vsub.s32 0, %v893
    %v895 = vrot.slane %v890, %v894
    %v913 = vunpack.c.l.b16 %v873
    %v914 = vunpack.c.l.b16 %v874
    %v915 = vunpack.c.l.b16 %v875
    %v916 = vunpack.c.l.b16 %v876
    %v917 = vunpack.c.l.b16 %v877
    %v918 = vunpack.c.l.b16 %v878
    %v919 = vunpack.c.l.b16 %v879
    %v920 = vunpack.c.l.b16 %v880
    %v921 = vunpack.c.l.b16 %v881
    %v922 = vunpack.c.l.b16 %v882
    %v923 = vunpack.c.l.b16 %v883
    %v924 = vunpack.c.l.b16 %v884
    %v925 = vunpack.c.l.b16 %v885
    %v926 = vunpack.c.l.b16 %v886
    %v927 = vunpack.c.l.b16 %v887
    %v928 = vunpack.c.l.b16 %v888
    %v929 = vpack.c.b16 %v914, %v913
    %v930 = vpack.c.b16 %v916, %v915
    %v931 = vpack.c.b16 %v918, %v917
    %v932 = vpack.c.b16 %v920, %v919
    %v933 = vpack.c.b16 %v922, %v921
    %v934 = vpack.c.b16 %v924, %v923
    %v935 = vpack.c.b16 %v926, %v925
    %v936 = vpack.c.b16 %v928, %v927
    %945 = vmatprep.subr.bf16.mxu0 0
    %946 = vmatpush1.bf16.msra.mxu0 %v929
    %947 = vmatprep.subr.bf16.mxu0 0
    %948 = vmatpush1.bf16.msra.mxu0 %v930
    %949 = vmatprep.subr.bf16.mxu0 0
    %950 = vmatpush1.bf16.msra.mxu0 %v931
    %951 = vmatprep.subr.bf16.mxu0 0
    %952 = vmatpush1.bf16.msra.mxu0 %v932
    %953 = vmatprep.subr.bf16.mxu0 0
    %954 = vmatpush1.bf16.msra.mxu0 %v933
    %955 = vmatprep.subr.bf16.mxu0 0
    %956 = vmatpush1.bf16.msra.mxu0 %v934
    %957 = vmatprep.subr.bf16.mxu0 0
    %958 = vmatpush1.bf16.msra.mxu0 %v935
    %959 = vmatprep.subr.bf16.mxu0 0
    %960 = vmatpush1.bf16.msra.mxu0 %v936
    %961 = vmatprep.subr.bf16.mxu0 0
    %962 = vmatpush1.bf16.msra.mxu0 0
    %963 = vmatprep.subr.bf16.mxu0 0
    %964 = vmatpush1.bf16.msra.mxu0 0
    %965 = vmatprep.subr.bf16.mxu0 0
    %966 = vmatpush1.bf16.msra.mxu0 0
    %967 = vmatprep.subr.bf16.mxu0 0
    %968 = vmatpush1.bf16.msra.mxu0 0
    %969 = vmatprep.subr.bf16.mxu0 0
    %970 = vmatpush1.bf16.msra.mxu0 0
    %971 = vmatprep.subr.bf16.mxu0 0
    %972 = vmatpush1.bf16.msra.mxu0 0
    %973 = vmatprep.subr.bf16.mxu0 0
    %974 = vmatpush1.bf16.msra.mxu0 0
    %975 = vmatprep.subr.bf16.mxu0 0
    %976 = vmatpush1.bf16.msra.mxu0 0
    %977 = vmatprep.mubr.bf16.mxu0 0
    %978 = vmatmul.mubr.bf16.gmra.mrb[0].mxu0 %v871
    %v979 = vpop.f32.mrb[0].mxu0
    %v980 = vadd.f32 %v895, %v979
    %v981 = vpop.f32.mrb[0].mxu0
    %v982 = vpop.f32.mrb[0].mxu0
    %v983 = vpop.f32.mrb[0].mxu0
    %984 = vdwg.mxu0
    %v985 = vmax.f32 %v980, 0.0
    %v986 = vpack.c.bf16 %v985, %v985
    %s987 = scalar_lea.vmem [#allocation5], 448
    %v988 = vld [vmem:[%s987] sm:$0xf]
    %v989 = vld [vmem:[%s987 + $0x4] sm:$0xf]
    %v990 = vld [vmem:[%s987 + $0x8] sm:$0xf]
    %v991 = vld [vmem:[%s987 + $0xc] sm:$0xf]
    %v992 = vld [vmem:[%s987 + $0x10] sm:$0xf]
    %v993 = vld [vmem:[%s987 + $0x14] sm:$0xf]
    %v994 = vld [vmem:[%s987 + $0x18] sm:$0xf]
    %v995 = vld [vmem:[%s987 + $0x1c] sm:$0xf]
    %v996 = vld [vmem:[%s987 + $0x20] sm:$0xf]
    %v997 = vld [vmem:[%s987 + $0x24] sm:$0xf]
    %v998 = vld [vmem:[%s987 + $0x28] sm:$0xf]
    %v999 = vld [vmem:[%s987 + $0x2c] sm:$0xf]
    %v1000 = vld [vmem:[%s987 + $0x30] sm:$0xf]
    %v1001 = vld [vmem:[%s987 + $0x34] sm:$0xf]
    %v1002 = vld [vmem:[%s987 + $0x38] sm:$0xf]
    %v1003 = vld [vmem:[%s987 + $0x3c] sm:$0xf]
    %s1004 = scalar_lea.vmem %s4, 7
    %v1005 = vld [vmem:[%s1004] sm:$0x1]
    %v1007 = vlaneseq
    %v1008 = vshrl.u32 %v1007, 7
    %v1009 = vsub.s32 0, %v1008
    %v1010 = vrot.slane %v1005, %v1009
    %v1028 = vunpack.c.l.b16 %v988
    %v1029 = vunpack.c.l.b16 %v989
    %v1030 = vunpack.c.l.b16 %v990
    %v1031 = vunpack.c.l.b16 %v991
    %v1032 = vunpack.c.l.b16 %v992
    %v1033 = vunpack.c.l.b16 %v993
    %v1034 = vunpack.c.l.b16 %v994
    %v1035 = vunpack.c.l.b16 %v995
    %v1036 = vunpack.c.l.b16 %v996
    %v1037 = vunpack.c.l.b16 %v997
    %v1038 = vunpack.c.l.b16 %v998
    %v1039 = vunpack.c.l.b16 %v999
    %v1040 = vunpack.c.l.b16 %v1000
    %v1041 = vunpack.c.l.b16 %v1001
    %v1042 = vunpack.c.l.b16 %v1002
    %v1043 = vunpack.c.l.b16 %v1003
    %v1044 = vpack.c.b16 %v1029, %v1028
    %v1045 = vpack.c.b16 %v1031, %v1030
    %v1046 = vpack.c.b16 %v1033, %v1032
    %v1047 = vpack.c.b16 %v1035, %v1034
    %v1048 = vpack.c.b16 %v1037, %v1036
    %v1049 = vpack.c.b16 %v1039, %v1038
    %v1050 = vpack.c.b16 %v1041, %v1040
    %v1051 = vpack.c.b16 %v1043, %v1042
    %1060 = vmatprep.subr.bf16.mxu0 0
    %1061 = vmatpush1.bf16.msra.mxu0 %v1044
    %1062 = vmatprep.subr.bf16.mxu0 0
    %1063 = vmatpush1.bf16.msra.mxu0 %v1045
    %1064 = vmatprep.subr.bf16.mxu0 0
    %1065 = vmatpush1.bf16.msra.mxu0 %v1046
    %1066 = vmatprep.subr.bf16.mxu0 0
    %1067 = vmatpush1.bf16.msra.mxu0 %v1047
    %1068 = vmatprep.subr.bf16.mxu0 0
    %1069 = vmatpush1.bf16.msra.mxu0 %v1048
    %1070 = vmatprep.subr.bf16.mxu0 0
    %1071 = vmatpush1.bf16.msra.mxu0 %v1049
    %1072 = vmatprep.subr.bf16.mxu0 0
    %1073 = vmatpush1.bf16.msra.mxu0 %v1050
    %1074 = vmatprep.subr.bf16.mxu0 0
    %1075 = vmatpush1.bf16.msra.mxu0 %v1051
    %1076 = vmatprep.subr.bf16.mxu0 0
    %1077 = vmatpush1.bf16.msra.mxu0 0
    %1078 = vmatprep.subr.bf16.mxu0 0
    %1079 = vmatpush1.bf16.msra.mxu0 0
    %1080 = vmatprep.subr.bf16.mxu0 0
    %1081 = vmatpush1.bf16.msra.mxu0 0
    %1082 = vmatprep.subr.bf16.mxu0 0
    %1083 = vmatpush1.bf16.msra.mxu0 0
    %1084 = vmatprep.subr.bf16.mxu0 0
    %1085 = vmatpush1.bf16.msra.mxu0 0
    %1086 = vmatprep.subr.bf16.mxu0 0
    %1087 = vmatpush1.bf16.msra.mxu0 0
    %1088 = vmatprep.subr.bf16.mxu0 0
    %1089 = vmatpush1.bf16.msra.mxu0 0
    %1090 = vmatprep.subr.bf16.mxu0 0
    %1091 = vmatpush1.bf16.msra.mxu0 0
    %1092 = vmatprep.mubr.bf16.mxu0 0
    %1093 = vmatmul.mubr.bf16.gmra.mrb[0].mxu0 %v986
    %v1094 = vpop.f32.mrb[0].mxu0
    %v1095 = vadd.f32 %v1010, %v1094
    %v1096 = vpop.f32.mrb[0].mxu0
    %v1097 = vpop.f32.mrb[0].mxu0
    %v1098 = vpop.f32.mrb[0].mxu0
    %1099 = vdwg.mxu0
    %v1100 = vmax.f32 %v1095, 0.0
    %v1101 = vpack.c.bf16 %v1100, %v1100
    %s1102 = scalar_lea.vmem [#allocation5], 512
    %v1103 = vld [vmem:[%s1102] sm:$0xf]
    %v1104 = vld [vmem:[%s1102 + $0x4] sm:$0xf]
    %v1105 = vld [vmem:[%s1102 + $0x8] sm:$0xf]
    %v1106 = vld [vmem:[%s1102 + $0xc] sm:$0xf]
    %v1107 = vld [vmem:[%s1102 + $0x10] sm:$0xf]
    %v1108 = vld [vmem:[%s1102 + $0x14] sm:$0xf]
    %v1109 = vld [vmem:[%s1102 + $0x18] sm:$0xf]
    %v1110 = vld [vmem:[%s1102 + $0x1c] sm:$0xf]
    %v1111 = vld [vmem:[%s1102 + $0x20] sm:$0xf]
    %v1112 = vld [vmem:[%s1102 + $0x24] sm:$0xf]
    %v1113 = vld [vmem:[%s1102 + $0x28] sm:$0xf]
    %v1114 = vld [vmem:[%s1102 + $0x2c] sm:$0xf]
    %v1115 = vld [vmem:[%s1102 + $0x30] sm:$0xf]
    %v1116 = vld [vmem:[%s1102 + $0x34] sm:$0xf]
    %v1117 = vld [vmem:[%s1102 + $0x38] sm:$0xf]
    %v1118 = vld [vmem:[%s1102 + $0x3c] sm:$0xf]
    %s1119 = scalar_lea.vmem %s4, 8
    %v1120 = vld [vmem:[%s1119] sm:$0x1]
    %v1122 = vlaneseq
    %v1123 = vshrl.u32 %v1122, 7
    %v1124 = vsub.s32 0, %v1123
    %v1125 = vrot.slane %v1120, %v1124
    %v1143 = vunpack.c.l.b16 %v1103
    %v1144 = vunpack.c.l.b16 %v1104
    %v1145 = vunpack.c.l.b16 %v1105
    %v1146 = vunpack.c.l.b16 %v1106
    %v1147 = vunpack.c.l.b16 %v1107
    %v1148 = vunpack.c.l.b16 %v1108
    %v1149 = vunpack.c.l.b16 %v1109
    %v1150 = vunpack.c.l.b16 %v1110
    %v1151 = vunpack.c.l.b16 %v1111
    %v1152 = vunpack.c.l.b16 %v1112
    %v1153 = vunpack.c.l.b16 %v1113
    %v1154 = vunpack.c.l.b16 %v1114
    %v1155 = vunpack.c.l.b16 %v1115
    %v1156 = vunpack.c.l.b16 %v1116
    %v1157 = vunpack.c.l.b16 %v1117
    %v1158 = vunpack.c.l.b16 %v1118
    %v1159 = vpack.c.b16 %v1144, %v1143
    %v1160 = vpack.c.b16 %v1146, %v1145
    %v1161 = vpack.c.b16 %v1148, %v1147
    %v1162 = vpack.c.b16 %v1150, %v1149
    %v1163 = vpack.c.b16 %v1152, %v1151
    %v1164 = vpack.c.b16 %v1154, %v1153
    %v1165 = vpack.c.b16 %v1156, %v1155
    %v1166 = vpack.c.b16 %v1158, %v1157
    %1175 = vmatprep.subr.bf16.mxu0 0
    %1176 = vmatpush1.bf16.msra.mxu0 %v1159
    %1177 = vmatprep.subr.bf16.mxu0 0
    %1178 = vmatpush1.bf16.msra.mxu0 %v1160
    %1179 = vmatprep.subr.bf16.mxu0 0
    %1180 = vmatpush1.bf16.msra.mxu0 %v1161
    %1181 = vmatprep.subr.bf16.mxu0 0
    %1182 = vmatpush1.bf16.msra.mxu0 %v1162
    %1183 = vmatprep.subr.bf16.mxu0 0
    %1184 = vmatpush1.bf16.msra.mxu0 %v1163
    %1185 = vmatprep.subr.bf16.mxu0 0
    %1186 = vmatpush1.bf16.msra.mxu0 %v1164
    %1187 = vmatprep.subr.bf16.mxu0 0
    %1188 = vmatpush1.bf16.msra.mxu0 %v1165
    %1189 = vmatprep.subr.bf16.mxu0 0
    %1190 = vmatpush1.bf16.msra.mxu0 %v1166
    %1191 = vmatprep.subr.bf16.mxu0 0
    %1192 = vmatpush1.bf16.msra.mxu0 0
    %1193 = vmatprep.subr.bf16.mxu0 0
    %1194 = vmatpush1.bf16.msra.mxu0 0
    %1195 = vmatprep.subr.bf16.mxu0 0
    %1196 = vmatpush1.bf16.msra.mxu0 0
    %1197 = vmatprep.subr.bf16.mxu0 0
    %1198 = vmatpush1.bf16.msra.mxu0 0
    %1199 = vmatprep.subr.bf16.mxu0 0
    %1200 = vmatpush1.bf16.msra.mxu0 0
    %1201 = vmatprep.subr.bf16.mxu0 0
    %1202 = vmatpush1.bf16.msra.mxu0 0
    %1203 = vmatprep.subr.bf16.mxu0 0
    %1204 = vmatpush1.bf16.msra.mxu0 0
    %1205 = vmatprep.subr.bf16.mxu0 0
    %1206 = vmatpush1.bf16.msra.mxu0 0
    %1207 = vmatprep.mubr.bf16.mxu0 0
    %1208 = vmatmul.mubr.bf16.gmra.mrb[0].mxu0 %v1101
    %v1209 = vpop.f32.mrb[0].mxu0
    %v1210 = vadd.f32 %v1125, %v1209
    %v1211 = vpop.f32.mrb[0].mxu0
    %v1212 = vpop.f32.mrb[0].mxu0
    %v1213 = vpop.f32.mrb[0].mxu0
    %1214 = vdwg.mxu0
    %v1215 = vmax.f32 %v1210, 0.0
    %v1216 = vpack.c.bf16 %v1215, %v1215
    %s1217 = scalar_lea.vmem [#allocation5], 576
    %v1218 = vld [vmem:[%s1217] sm:$0xf]
    %v1219 = vld [vmem:[%s1217 + $0x4] sm:$0xf]
    %v1220 = vld [vmem:[%s1217 + $0x8] sm:$0xf]
    %v1221 = vld [vmem:[%s1217 + $0xc] sm:$0xf]
    %v1222 = vld [vmem:[%s1217 + $0x10] sm:$0xf]
    %v1223 = vld [vmem:[%s1217 + $0x14] sm:$0xf]
    %v1224 = vld [vmem:[%s1217 + $0x18] sm:$0xf]
    %v1225 = vld [vmem:[%s1217 + $0x1c] sm:$0xf]
    %v1226 = vld [vmem:[%s1217 + $0x20] sm:$0xf]
    %v1227 = vld [vmem:[%s1217 + $0x24] sm:$0xf]
    %v1228 = vld [vmem:[%s1217 + $0x28] sm:$0xf]
    %v1229 = vld [vmem:[%s1217 + $0x2c] sm:$0xf]
    %v1230 = vld [vmem:[%s1217 + $0x30] sm:$0xf]
    %v1231 = vld [vmem:[%s1217 + $0x34] sm:$0xf]
    %v1232 = vld [vmem:[%s1217 + $0x38] sm:$0xf]
    %v1233 = vld [vmem:[%s1217 + $0x3c] sm:$0xf]
    %s1234 = scalar_lea.vmem %s4, 9
    %v1235 = vld [vmem:[%s1234] sm:$0x1]
    %v1237 = vlaneseq
    %v1238 = vshrl.u32 %v1237, 7
    %v1239 = vsub.s32 0, %v1238
    %v1240 = vrot.slane %v1235, %v1239
    %v1258 = vunpack.c.l.b16 %v1218
    %v1259 = vunpack.c.l.b16 %v1219
    %v1260 = vunpack.c.l.b16 %v1220
    %v1261 = vunpack.c.l.b16 %v1221
    %v1262 = vunpack.c.l.b16 %v1222
    %v1263 = vunpack.c.l.b16 %v1223
    %v1264 = vunpack.c.l.b16 %v1224
    %v1265 = vunpack.c.l.b16 %v1225
    %v1266 = vunpack.c.l.b16 %v1226
    %v1267 = vunpack.c.l.b16 %v1227
    %v1268 = vunpack.c.l.b16 %v1228
    %v1269 = vunpack.c.l.b16 %v1229
    %v1270 = vunpack.c.l.b16 %v1230
    %v1271 = vunpack.c.l.b16 %v1231
    %v1272 = vunpack.c.l.b16 %v1232
    %v1273 = vunpack.c.l.b16 %v1233
    %v1274 = vpack.c.b16 %v1259, %v1258
    %v1275 = vpack.c.b16 %v1261, %v1260
    %v1276 = vpack.c.b16 %v1263, %v1262
    %v1277 = vpack.c.b16 %v1265, %v1264
    %v1278 = vpack.c.b16 %v1267, %v1266
    %v1279 = vpack.c.b16 %v1269, %v1268
    %v1280 = vpack.c.b16 %v1271, %v1270
    %v1281 = vpack.c.b16 %v1273, %v1272
    %1290 = vmatprep.subr.bf16.mxu0 0
    %1291 = vmatpush1.bf16.msra.mxu0 %v1274
    %1292 = vmatprep.subr.bf16.mxu0 0
    %1293 = vmatpush1.bf16.msra.mxu0 %v1275
    %1294 = vmatprep.subr.bf16.mxu0 0
    %1295 = vmatpush1.bf16.msra.mxu0 %v1276
    %1296 = vmatprep.subr.bf16.mxu0 0
    %1297 = vmatpush1.bf16.msra.mxu0 %v1277
    %1298 = vmatprep.subr.bf16.mxu0 0
    %1299 = vmatpush1.bf16.msra.mxu0 %v1278
    %1300 = vmatprep.subr.bf16.mxu0 0
    %1301 = vmatpush1.bf16.msra.mxu0 %v1279
    %1302 = vmatprep.subr.bf16.mxu0 0
    %1303 = vmatpush1.bf16.msra.mxu0 %v1280
    %1304 = vmatprep.subr.bf16.mxu0 0
    %1305 = vmatpush1.bf16.msra.mxu0 %v1281
    %1306 = vmatprep.subr.bf16.mxu0 0
    %1307 = vmatpush1.bf16.msra.mxu0 0
    %1308 = vmatprep.subr.bf16.mxu0 0
    %1309 = vmatpush1.bf16.msra.mxu0 0
    %1310 = vmatprep.subr.bf16.mxu0 0
    %1311 = vmatpush1.bf16.msra.mxu0 0
    %1312 = vmatprep.subr.bf16.mxu0 0
    %1313 = vmatpush1.bf16.msra.mxu0 0
    %1314 = vmatprep.subr.bf16.mxu0 0
    %1315 = vmatpush1.bf16.msra.mxu0 0
    %1316 = vmatprep.subr.bf16.mxu0 0
    %1317 = vmatpush1.bf16.msra.mxu0 0
    %1318 = vmatprep.subr.bf16.mxu0 0
    %1319 = vmatpush1.bf16.msra.mxu0 0
    %1320 = vmatprep.subr.bf16.mxu0 0
    %1321 = vmatpush1.bf16.msra.mxu0 0
    %1322 = vmatprep.mubr.bf16.mxu0 0
    %1323 = vmatmul.mubr.bf16.gmra.mrb[0].mxu0 %v1216
    %v1324 = vpop.f32.mrb[0].mxu0
    %v1325 = vadd.f32 %v1240, %v1324
    %v1326 = vpop.f32.mrb[0].mxu0
    %v1327 = vpop.f32.mrb[0].mxu0
    %v1328 = vpop.f32.mrb[0].mxu0
    %1329 = vdwg.mxu0
    %v1330 = vmax.f32 %v1325, 0.0
    %v1331 = vpack.c.bf16 %v1330, %v1330
    %v1332 = vld [vmem:[#allocation7] sm:$0xf]
    %v1333 = vld [vmem:[#allocation7 + $0x4] sm:$0xf]
    %v1334 = vld [vmem:[#allocation7 + $0x8] sm:$0xf]
    %v1335 = vld [vmem:[#allocation7 + $0xc] sm:$0xf]
    %v1336 = vld [vmem:[#allocation7 + $0x10] sm:$0xf]
    %v1337 = vld [vmem:[#allocation7 + $0x14] sm:$0xf]
    %v1338 = vld [vmem:[#allocation7 + $0x18] sm:$0xf]
    %v1339 = vld [vmem:[#allocation7 + $0x1c] sm:$0xf]
    %v1340 = vld [vmem:[#allocation7 + $0x20] sm:$0xf]
    %v1341 = vld [vmem:[#allocation7 + $0x24] sm:$0xf]
    %v1342 = vld [vmem:[#allocation7 + $0x28] sm:$0xf]
    %v1343 = vld [vmem:[#allocation7 + $0x2c] sm:$0xf]
    %v1344 = vld [vmem:[#allocation7 + $0x30] sm:$0xf]
    %v1345 = vld [vmem:[#allocation7 + $0x34] sm:$0xf]
    %v1346 = vld [vmem:[#allocation7 + $0x38] sm:$0xf]
    %v1347 = vld [vmem:[#allocation7 + $0x3c] sm:$0xf]
    %v1348 = vld [vmem:[%s6] sm:$0x1]
    %v1350 = vlaneseq
    %v1351 = vshrl.u32 %v1350, 7
    %v1352 = vsub.s32 0, %v1351
    %v1353 = vrot.slane %v1348, %v1352
    %v1371 = vunpack.c.l.b16 %v1332
    %v1372 = vunpack.c.l.b16 %v1333
    %v1373 = vunpack.c.l.b16 %v1334
    %v1374 = vunpack.c.l.b16 %v1335
    %v1375 = vunpack.c.l.b16 %v1336
    %v1376 = vunpack.c.l.b16 %v1337
    %v1377 = vunpack.c.l.b16 %v1338
    %v1378 = vunpack.c.l.b16 %v1339
    %v1379 = vunpack.c.l.b16 %v1340
    %v1380 = vunpack.c.l.b16 %v1341
    %v1381 = vunpack.c.l.b16 %v1342
    %v1382 = vunpack.c.l.b16 %v1343
    %v1383 = vunpack.c.l.b16 %v1344
    %v1384 = vunpack.c.l.b16 %v1345
    %v1385 = vunpack.c.l.b16 %v1346
    %v1386 = vunpack.c.l.b16 %v1347
    %v1387 = vpack.c.b16 %v1372, %v1371
    %v1388 = vpack.c.b16 %v1374, %v1373
    %v1389 = vpack.c.b16 %v1376, %v1375
    %v1390 = vpack.c.b16 %v1378, %v1377
    %v1391 = vpack.c.b16 %v1380, %v1379
    %v1392 = vpack.c.b16 %v1382, %v1381
    %v1393 = vpack.c.b16 %v1384, %v1383
    %v1394 = vpack.c.b16 %v1386, %v1385
    %1403 = vmatprep.subr.bf16.mxu0 0
    %1404 = vmatpush1.bf16.msra.mxu0 %v1387
    %1405 = vmatprep.subr.bf16.mxu0 0
    %1406 = vmatpush1.bf16.msra.mxu0 %v1388
    %1407 = vmatprep.subr.bf16.mxu0 0
    %1408 = vmatpush1.bf16.msra.mxu0 %v1389
    %1409 = vmatprep.subr.bf16.mxu0 0
    %1410 = vmatpush1.bf16.msra.mxu0 %v1390
    %1411 = vmatprep.subr.bf16.mxu0 0
    %1412 = vmatpush1.bf16.msra.mxu0 %v1391
    %1413 = vmatprep.subr.bf16.mxu0 0
    %1414 = vmatpush1.bf16.msra.mxu0 %v1392
    %1415 = vmatprep.subr.bf16.mxu0 0
    %1416 = vmatpush1.bf16.msra.mxu0 %v1393
    %1417 = vmatprep.subr.bf16.mxu0 0
    %1418 = vmatpush1.bf16.msra.mxu0 %v1394
    %1419 = vmatprep.subr.bf16.mxu0 0
    %1420 = vmatpush1.bf16.msra.mxu0 0
    %1421 = vmatprep.subr.bf16.mxu0 0
    %1422 = vmatpush1.bf16.msra.mxu0 0
    %1423 = vmatprep.subr.bf16.mxu0 0
    %1424 = vmatpush1.bf16.msra.mxu0 0
    %1425 = vmatprep.subr.bf16.mxu0 0
    %1426 = vmatpush1.bf16.msra.mxu0 0
    %1427 = vmatprep.subr.bf16.mxu0 0
    %1428 = vmatpush1.bf16.msra.mxu0 0
    %1429 = vmatprep.subr.bf16.mxu0 0
    %1430 = vmatpush1.bf16.msra.mxu0 0
    %1431 = vmatprep.subr.bf16.mxu0 0
    %1432 = vmatpush1.bf16.msra.mxu0 0
    %1433 = vmatprep.subr.bf16.mxu0 0
    %1434 = vmatpush1.bf16.msra.mxu0 0
    %1435 = vmatprep.mubr.bf16.mxu0 0
    %1436 = vmatmul.mubr.bf16.gmra.mrb[0].mxu0 %v1331
    %v1437 = vpop.f32.mrb[0].mxu0
    %v1438 = vadd.f32 %v1353, %v1437
    %v1439 = vpop.f32.mrb[0].mxu0
    %v1440 = vpop.f32.mrb[0].mxu0
    %v1441 = vpop.f32.mrb[0].mxu0
    %1442 = vdwg.mxu0
    %1443 = vst [vmem:[#allocation8] sm:$0xff] %v1438
    // Predicated region
    $region42: #{pinn_forward.1} parent=1 // pred_check
      _
    $region43: #{pinn_forward.1} parent=1 // pred_check_branch
      %1445 = sbr.rel (0) target = $region45
    $region44: #{pinn_forward.1} parent=1 // pred_region
      %s1447 = ssub.s32 128, 128
      %1448 = vsyncadd [#allocation4], %s1447
      %s1450 = sshll.u32 [#allocation8], 4
      %s1451 = int_to_ptr.vmem [resolvable:$true] %s1450
      %1453 = dma.vmem_to_hbm [thread:$0]  %s1451, 128, %s7, [#allocation4]
    $region45: #{pinn_forward.1} parent=1 // pred_fallthru
      _
    // Predicated region
    $region46: #{pinn_forward.1} parent=1 // pred_check
      _
    $region47: #{pinn_forward.1} parent=1 // pred_check_branch
      %1455 = sbr.rel (0) target = $region49
    $region48: #{pinn_forward.1} parent=1 // pred_region
      %1456 = dma.done [#allocation4], 128
    $region49: #{pinn_forward.1} parent=1 // pred_fallthru
      _
    %1457 = vsyncpa [#allocation3], 1
    %1458 = vsyncpa [#allocation6], 1
    %1459 = vsyncpa [#allocation4], 1

</llo_original>
